<compile_context>
chip_gen: v5e
topology: v5e:2x2
jax: 0.10.0
libtpu: 0.0.40
codegen_flags: <defaults>
</compile_context>

<pallas_src>
import jax
import jax.numpy as jnp
from jax.experimental import pallas as pl
from jax.experimental.pallas import tpu as pltpu

_EPS = 1e-5  # torch.nn.LayerNorm default eps


def _round_up(v, m):
    return -(-v // m) * m


def _layer_norm(x, w, b):
    # w, b are (1, H) rows; broadcasting over the (TB, H) tile is implicit.
    mean = jnp.mean(x, axis=-1, keepdims=True)
    var = jnp.mean((x - mean) ** 2, axis=-1, keepdims=True)
    return (x - mean) * jax.lax.rsqrt(var + _EPS) * w + b


# LN table row layout (each row is length H):
#   0,1  : merge_ln  w,b
#   2,3  : f_ln      w,b
#   4,5  : iou_ln[0] w,b      (i gate)
#   6,7  : iou_ln[1] w,b      (o gate)
#   8,9  : iou_ln[2] w,b      (u)
#  10,11 : cell_ln   w,b
def _make_kernel(H, A, N, TB):
    def kernel(x_ref, he_ref, c_ref, wx_ref, whe_ref, wm_ref, ln_ref, out_ref):
        HE = he_ref.shape[1]                       # H + E

        # ---- fused MXU pushes --------------------------------------------
        # x @ [W_fi | W_iou_x] -> (TB, >=4H): forget input term + i/o/u input term.
        xw = jnp.dot(x_ref[...], wx_ref[...], preferred_element_type=jnp.float32)
        f_x = xw[:, 0:H]                           # (TB, H)
        iou_x = xw[:, H:4 * H]                     # (TB, 3H)

        # all children in one push:
        # [h | ext] @ [[W_fh, W_att_h], [0, W_att_e]] -> (N*TB, >=H+A)
        hw = jnp.dot(he_ref[...], whe_ref[0:HE, :], preferred_element_type=jnp.float32)

        # attention scoring vector rides along as the last slab row.
        w_att = whe_ref[HE:HE + 1, H:H + A]        # (1, A)

        # forget-gate LN params (shared across children), kept as (1, H) rows.
        f_ln_w = ln_ref[2:3, :]
        f_ln_b = ln_ref[3:4, :]

        # ---- single online pass over the children -------------------------
        # softmax over children (running max / rescaled accumulators) fused with
        # the forget-gated cell accumulation.
        m = jnp.full((TB, 1), -jnp.inf, jnp.float32)
        denom = jnp.zeros((TB, 1), jnp.float32)
        h_acc = jnp.zeros((TB, H), jnp.float32)
        fc_acc = jnp.zeros((TB, H), jnp.float32)
        for n in range(N):                         # static unroll, N is small
            r0 = n * TB
            att = jnp.tanh(hw[r0:r0 + TB, H:H + A])                    # (TB, A)
            s_n = jnp.sum(att * w_att, axis=-1, keepdims=True)         # (TB, 1)
            m_new = jnp.maximum(m, s_n)
            scale = jnp.exp(m - m_new)             # 0 on the first child (m=-inf)
            e_n = jnp.exp(s_n - m_new)
            denom = denom * scale + e_n
            h_n = he_ref[r0:r0 + TB, 0:H].astype(jnp.float32)
            h_acc = h_acc * scale + e_n * h_n
            m = m_new

            f_lin = _layer_norm(f_x + hw[r0:r0 + TB, 0:H], f_ln_w, f_ln_b)
            fc_acc = fc_acc + jax.nn.sigmoid(f_lin) * c_ref[r0:r0 + TB, :]

        # softmax-weighted child-hidden sum; reciprocal on the EUP slot.
        merged_w = h_acc * pl.reciprocal(denom, approx=True)            # (TB, H)

        # ---- attentive merge -> i/o/u --------------------------------------
        merged_pre = jnp.dot(merged_w.astype(wm_ref.dtype), wm_ref[:, 0:H],
                             preferred_element_type=jnp.float32)
        merged = jnp.tanh(_layer_norm(merged_pre, ln_ref[0:1, :], ln_ref[1:2, :]))
        iou = iou_x + jnp.dot(merged.astype(wm_ref.dtype), wm_ref[:, H:4 * H],
                              preferred_element_type=jnp.float32)

        i_g = jax.nn.sigmoid(_layer_norm(iou[:, 0:H], ln_ref[4:5, :], ln_ref[5:6, :]))
        o_g = jax.nn.sigmoid(_layer_norm(iou[:, H:2 * H], ln_ref[6:7, :], ln_ref[7:8, :]))
        u = jnp.tanh(_layer_norm(iou[:, 2 * H:3 * H], ln_ref[8:9, :], ln_ref[9:10, :]))
        # TODO(synk): recurrent dropout treated as identity (inference / p=0)

        new_c = _layer_norm(i_g * u + fc_acc, ln_ref[10:11, :], ln_ref[11:12, :])
        new_h = o_g * jnp.tanh(new_c)

        # single store of the (TB, 2H) slab.
        out_ref[...] = jnp.concatenate([new_h, new_c], axis=1).astype(out_ref.dtype)

    return kernel


def init_params(key, input_size, hidden_size, external_size):
    """Deterministic parameter init (PyTorch weight layout: (out, in))."""
    H, I, E = hidden_size, input_size, external_size
    A = (H + E) // 2
    ks = jax.random.split(key, 6)
    s = 0.1
    return {
        "w_att_in": jax.random.normal(ks[0], (A, H + E), jnp.float32) * s,  # no bias
        "w_att":    jax.random.normal(ks[1], (1, A), jnp.float32) * s,      # no bias, elementwise=False
        "w_merge":  jax.random.normal(ks[2], (H, H), jnp.float32) * s,      # no bias (LN enabled)
        "w_iou":    jax.random.normal(ks[3], (3 * H, I + H), jnp.float32) * s,
        "w_fi":     jax.random.normal(ks[4], (H, I), jnp.float32) * s,
        "w_fh":     jax.random.normal(ks[5], (H, H), jnp.float32) * s,
        "merge_ln_w": jnp.ones((1, H), jnp.float32),
        "merge_ln_b": jnp.zeros((1, H), jnp.float32),
        "f_ln_w":     jnp.ones((1, H), jnp.float32),
        "f_ln_b":     jnp.zeros((1, H), jnp.float32),
        "iou_ln_w":   jnp.ones((3, H), jnp.float32),
        "iou_ln_b":   jnp.zeros((3, H), jnp.float32),
        "cell_ln_w":  jnp.ones((1, H), jnp.float32),
        "cell_ln_b":  jnp.zeros((1, H), jnp.float32),
    }


def attentive_childsum_treelstm_cells(x, external, hiddens, cells, params, *,
                                      tile_b=128, min_tiles=1, mxu_dtype=None):
    """Batched forward for B independent cells (same child count N).

    x: (B, I), external: (B, E), hiddens/cells: (B, N, H).
    Returns (new_h, new_c), each (B, H).

    tile_b:     batch-tile size (rows on the sublane axis). 128+ fills the MXU.
    min_tiles:  set to 2 on v7x so the 'parallel' grid axis can shard across
                both TensorCores even when the whole batch fits in one tile.
    mxu_dtype:  set to jnp.bfloat16 on v6e/v7x to halve child-tensor DMA and use
                the bf16-native MXU (elementwise/LN math stays f32).
    """
    B, N, H = hiddens.shape
    I = x.shape[1]
    E = external.shape[1]
    A = params["w_att_in"].shape[0]

    f32 = jnp.float32
    sub = 16 if mxu_dtype == jnp.bfloat16 else 8     # bf16 sublane packing
    TB = max(sub, min(_round_up(tile_b, sub), _round_up(B, sub)))
    if min_tiles > 1:
        TB = max(sub, min(TB, _round_up(_round_up(B, sub) // min_tiles, sub)))
    n_tiles = -(-B // TB)
    B_pad = n_tiles * TB

    x = x.astype(f32)
    external = external.astype(f32)
    hiddens = hiddens.astype(f32)
    cells = cells.astype(f32)
    if B_pad != B:
        pad = B_pad - B
        x = jnp.pad(x, ((0, pad), (0, 0)))
        external = jnp.pad(external, ((0, pad), (0, 0)))
        hiddens = jnp.pad(hiddens, ((0, pad), (0, 0), (0, 0)))
        cells = jnp.pad(cells, ((0, pad), (0, 0), (0, 0)))

    # Child-major packing per batch tile, with the external vector replicated per
    # child and fused onto the lane axis:
    #   row i*N*TB + n*TB + t  <-  [ h[node i*TB+t, child n] | ext[node i*TB+t] ]
    h_cm = hiddens.reshape(n_tiles, TB, N, H).transpose(0, 2, 1, 3)
    e_cm = jnp.broadcast_to(external.reshape(n_tiles, 1, TB, E), (n_tiles, N, TB, E))
    he_packed = jnp.concatenate([h_cm, e_cm], axis=-1).reshape(n_tiles * N * TB, H + E)
    c_packed = (cells.reshape(n_tiles, TB, N, H)
                     .transpose(0, 2, 1, 3)
                     .reshape(n_tiles * N * TB, H))

    # Fused weight slabs, (in, out) layout, output columns zero-padded to 128 lanes.
    P4H = _round_up(4 * H, 128)
    PHA = _round_up(H + A, 128)

    wx = jnp.zeros((I, P4H), f32)
    wx = wx.at[:, 0:H].set(params["w_fi"].T)
    wx = wx.at[:, H:4 * H].set(params["w_iou"][:, :I].T)

    whe = jnp.zeros((H + E + 1, PHA), f32)
    whe = whe.at[0:H, 0:H].set(params["w_fh"].T)            # f-gate hidden path
    whe = whe.at[0:H + E, H:H + A].set(params["w_att_in"].T)  # attention path (h & ext)
    whe = whe.at[H + E, H:H + A].set(params["w_att"][0])      # scoring vector (transport row)

    wm = jnp.zeros((H, P4H), f32)
    wm = wm.at[:, 0:H].set(params["w_merge"].T)
    wm = wm.at[:, H:4 * H].set(params["w_iou"][:, I:].T)

    ln_table = jnp.concatenate([
        params["merge_ln_w"], params["merge_ln_b"],
        params["f_ln_w"], params["f_ln_b"],
        params["iou_ln_w"][0:1], params["iou_ln_b"][0:1],
        params["iou_ln_w"][1:2], params["iou_ln_b"][1:2],
        params["iou_ln_w"][2:3], params["iou_ln_b"][2:3],
        params["cell_ln_w"], params["cell_ln_b"],
    ], axis=0)                                               # (12, H), always f32

    if mxu_dtype is not None:
        x_in = x.astype(mxu_dtype)
        he_in = he_packed.astype(mxu_dtype)
        wx = wx.astype(mxu_dtype)
        whe = whe.astype(mxu_dtype)
        wm = wm.astype(mxu_dtype)
    else:
        x_in, he_in = x, he_packed

    kernel = _make_kernel(H=H, A=A, N=N, TB=TB)

    out = pl.pallas_call(
        kernel,
        out_shape=jax.ShapeDtypeStruct((B_pad, 2 * H), jnp.float32),
        grid_spec=pltpu.PrefetchScalarGridSpec(
            num_scalar_prefetch=0,
            grid=(n_tiles,),
            in_specs=[
                pl.BlockSpec((TB, I), lambda i: (i, 0)),
                pl.BlockSpec((N * TB, H + E), lambda i: (i, 0)),
                pl.BlockSpec((N * TB, H), lambda i: (i, 0)),
                pl.BlockSpec((I, P4H), lambda i: (0, 0)),
                pl.BlockSpec((H + E + 1, PHA), lambda i: (0, 0)),
                pl.BlockSpec((H, P4H), lambda i: (0, 0)),
                pl.BlockSpec((12, H), lambda i: (0, 0)),
            ],
            out_specs=pl.BlockSpec((TB, 2 * H), lambda i: (i, 0)),
        ),
        compiler_params=pltpu.CompilerParams(
            dimension_semantics=("parallel",),   # independent nodes -> megacore sharding
        ),
    )(x_in, he_in, c_packed, wx, whe, wm, ln_table)

    return out[:B, 0:H], out[:B, H:2 * H]


def attentive_childsum_treelstm_cell(x, external, hiddens, cells, params):
    """Single-node convenience wrapper matching the original module signature.
    x: (I,), external: (E,), hiddens/cells: (N, H). Returns (new_h, new_c), each (H,)."""
    new_h, new_c = attentive_childsum_treelstm_cells(
        x[None, :], external[None, :], hiddens[None, :, :], cells[None, :, :], params)
    return new_h[0], new_c[0]


def _reference(x, external, hiddens, cells, p):
    """Pure-JAX re-implementation of the PyTorch forward (single node), for verification."""
    def ln(v, w, b):
        m = jnp.mean(v, axis=-1, keepdims=True)
        var = jnp.mean((v - m) ** 2, axis=-1, keepdims=True)
        return (v - m) / jnp.sqrt(var + _EPS) * w + b

    H = hiddens.shape[1]
    f_lin = x @ p["w_fi"].T + hiddens @ p["w_fh"].T
    ext_rep = jnp.broadcast_to(external[None, :], (hiddens.shape[0], external.shape[0]))
    att_hid = jnp.tanh(jnp.concatenate([hiddens, ext_rep], axis=1) @ p["w_att_in"].T)
    scores = att_hid @ p["w_att"].T
    attn = jax.nn.softmax(scores, axis=0)
    merged = (hiddens * attn).sum(0)
    merged = jnp.tanh(ln(merged @ p["w_merge"].T, p["merge_ln_w"][0], p["merge_ln_b"][0]))
    iou = jnp.concatenate([x, merged], axis=0) @ p["w_iou"].T
    i_lin = ln(iou[0:H], p["iou_ln_w"][0], p["iou_ln_b"][0])
    o_lin = ln(iou[H:2 * H], p["iou_ln_w"][1], p["iou_ln_b"][1])
    u_lin = ln(iou[2 * H:3 * H], p["iou_ln_w"][2], p["iou_ln_b"][2])
    f_lin = ln(f_lin, p["f_ln_w"], p["f_ln_b"])
    f, i_g, o_g = jax.nn.sigmoid(f_lin), jax.nn.sigmoid(i_lin), jax.nn.sigmoid(o_lin)
    u = jnp.tanh(u_lin)
    new_c = ln(i_g * u + (f * cells).sum(0), p["cell_ln_w"][0], p["cell_ln_b"][0])
    new_h = o_g * jnp.tanh(new_c)
    return new_h, new_c


if __name__ == "__main__":
    key = jax.random.PRNGKey(0)
    INPUT_SIZE = 32
    HIDDEN_SIZE = 32
    EXTERNAL_SIZE = 32
    N_CHILDREN = 4
    BATCH = 16          # e.g. all nodes of one tree level evaluated together

    kp, kx, ke, kh, kc = jax.random.split(key, 5)
    params = init_params(kp, INPUT_SIZE, HIDDEN_SIZE, EXTERNAL_SIZE)
    x = jax.random.normal(kx, (BATCH, INPUT_SIZE), jnp.float32)
    external = jax.random.normal(ke, (BATCH, EXTERNAL_SIZE), jnp.float32)
    hiddens = jax.random.normal(kh, (BATCH, N_CHILDREN, HIDDEN_SIZE), jnp.float32)
    cells = jax.random.normal(kc, (BATCH, N_CHILDREN, HIDDEN_SIZE), jnp.float32)

    ref_h, ref_c = jax.vmap(lambda xx, ee, hh, cc: _reference(xx, ee, hh, cc, params))(
        x, external, hiddens, cells)

    # f32 batched kernel (exact semantics; approx-reciprocal softmax denominator)
    new_h, new_c = attentive_childsum_treelstm_cells(x, external, hiddens, cells, params)
    jax.block_until_ready((new_h, new_c))
    assert new_h.shape == (BATCH, HIDDEN_SIZE) and new_c.shape == (BATCH, HIDDEN_SIZE)
    assert jnp.allclose(new_h, ref_h, atol=1e-3, rtol=1e-3)
    assert jnp.allclose(new_c, ref_c, atol=1e-3, rtol=1e-3)

    # bf16 MXU-operand mode (v6e/v7x recommendation) — looser numerics expected.
    bh, bc = attentive_childsum_treelstm_cells(x, external, hiddens, cells, params,
                                               mxu_dtype=jnp.bfloat16)
    jax.block_until_ready((bh, bc))
    assert jnp.allclose(bh, ref_h, atol=5e-2, rtol=5e-2)
    assert jnp.allclose(bc, ref_c, atol=5e-2, rtol=5e-2)

    # Single-node wrapper (exercises the batch-padding path)
    sh, sc = attentive_childsum_treelstm_cell(x[0], external[0], hiddens[0], cells[0], params)
    jax.block_until_ready((sh, sc))
    rh, rc = _reference(x[0], external[0], hiddens[0], cells[0], params)
    assert jnp.allclose(sh, rh, atol=1e-3, rtol=1e-3)
    assert jnp.allclose(sc, rc, atol=1e-3, rtol=1e-3)

    print("KERNEL_OK")
</pallas_src>

<mosaic_0001>
module attributes {stable_mosaic.version = 11 : i64} {
  func.func @kernel(%arg0: i32, %arg1: memref<16x32xf32, #tpu.memory_space<vmem>>, %arg2: memref<64x64xf32, #tpu.memory_space<vmem>>, %arg3: memref<64x32xf32, #tpu.memory_space<vmem>>, %arg4: memref<32x128xf32, #tpu.memory_space<vmem>>, %arg5: memref<65x128xf32, #tpu.memory_space<vmem>>, %arg6: memref<32x128xf32, #tpu.memory_space<vmem>>, %arg7: memref<12x32xf32, #tpu.memory_space<vmem>>, %arg8: memref<16x64xf32, #tpu.memory_space<vmem>>) attributes {dimension_semantics = [#tpu.dimension_semantics<parallel>], iteration_bounds = array<i64: 1>, scalar_prefetch = 0 : i64, scratch_operands = 0 : i64, tpu.core_type = #tpu.core_type<tc>, window_params = [{transform_indices = @transform_0, window_bounds = array<i64: 16, 32>}, {transform_indices = @transform_1, window_bounds = array<i64: 64, 64>}, {transform_indices = @transform_2, window_bounds = array<i64: 64, 32>}, {pipeline_mode = #tpu.pipeline_mode<synchronous>, transform_indices = @transform_3, window_bounds = array<i64: 32, 128>}, {pipeline_mode = #tpu.pipeline_mode<synchronous>, transform_indices = @transform_4, window_bounds = array<i64: 65, 128>}, {pipeline_mode = #tpu.pipeline_mode<synchronous>, transform_indices = @transform_5, window_bounds = array<i64: 32, 128>}, {pipeline_mode = #tpu.pipeline_mode<synchronous>, transform_indices = @transform_6, window_bounds = array<i64: 12, 32>}, {transform_indices = @transform_7, window_bounds = array<i64: 16, 64>}]} {
    %c0 = arith.constant 0 : index
    %c0_0 = arith.constant 0 : index
    %0 = vector.load %arg1[%c0, %c0_0] : memref<16x32xf32, #tpu.memory_space<vmem>>, vector<16x32xf32>
    %c0_1 = arith.constant 0 : index
    %c0_2 = arith.constant 0 : index
    %1 = vector.load %arg4[%c0_1, %c0_2] : memref<32x128xf32, #tpu.memory_space<vmem>>, vector<32x128xf32>
    %cst = arith.constant dense<0.000000e+00> : vector<16x128xf32>
    %2 = tpu.matmul %0, %1, %cst {dimension_numbers = #tpu.dot_dimension_numbers<[1], [0], [0], [1], [0, 0, 1, 1], [], []>} : vector<16x32xf32>, vector<32x128xf32>, vector<16x128xf32> -> vector<16x128xf32>
    %3 = vector.extract_strided_slice %2 {offsets = [0, 0], sizes = [16, 32], strides = [1, 1]} : vector<16x128xf32> to vector<16x32xf32>
    %4 = vector.extract_strided_slice %2 {offsets = [0, 32], sizes = [16, 96], strides = [1, 1]} : vector<16x128xf32> to vector<16x96xf32>
    %c0_3 = arith.constant 0 : index
    %c0_4 = arith.constant 0 : index
    %5 = vector.load %arg2[%c0_3, %c0_4] : memref<64x64xf32, #tpu.memory_space<vmem>>, vector<64x64xf32>
    %c0_5 = arith.constant 0 : index
    %c0_6 = arith.constant 0 : index
    %6 = vector.load %arg5[%c0_5, %c0_6] : memref<65x128xf32, #tpu.memory_space<vmem>>, vector<64x128xf32>
    %cst_7 = arith.constant dense<0.000000e+00> : vector<64x128xf32>
    %7 = tpu.matmul %5, %6, %cst_7 {dimension_numbers = #tpu.dot_dimension_numbers<[1], [0], [0], [1], [0, 0, 1, 1], [], []>} : vector<64x64xf32>, vector<64x128xf32>, vector<64x128xf32> -> vector<64x128xf32>
    %c64 = arith.constant 64 : index
    %c32 = arith.constant 32 : index
    %8 = vector.load %arg5[%c64, %c32] : memref<65x128xf32, #tpu.memory_space<vmem>>, vector<1x32xf32>
    %c2 = arith.constant 2 : index
    %c0_8 = arith.constant 0 : index
    %9 = vector.load %arg7[%c2, %c0_8] : memref<12x32xf32, #tpu.memory_space<vmem>>, vector<1x32xf32>
    %c3 = arith.constant 3 : index
    %c0_9 = arith.constant 0 : index
    %10 = vector.load %arg7[%c3, %c0_9] : memref<12x32xf32, #tpu.memory_space<vmem>>, vector<1x32xf32>
    %cst_10 = arith.constant 0xFF800000 : f32
    %11 = vector.broadcast %cst_10 : f32 to vector<16x1xf32>
    %cst_11 = arith.constant 0.000000e+00 : f32
    %12 = vector.broadcast %cst_11 : f32 to vector<16x1xf32>
    %cst_12 = arith.constant 0.000000e+00 : f32
    %13 = vector.broadcast %cst_12 : f32 to vector<16x32xf32>
    %cst_13 = arith.constant 0.000000e+00 : f32
    %14 = vector.broadcast %cst_13 : f32 to vector<16x32xf32>
    %15 = vector.extract_strided_slice %7 {offsets = [0, 32], sizes = [16, 32], strides = [1, 1]} : vector<64x128xf32> to vector<16x32xf32>
    %16 = math.tanh %15 : vector<16x32xf32>
    %17 = vector.broadcast %8 : vector<1x32xf32> to vector<16x32xf32>
    %18 = arith.mulf %16, %17 : vector<16x32xf32>
    %cst_14 = arith.constant dense<0.000000e+00> : vector<16xf32>
    %19 = vector.multi_reduction <add>, %18, %cst_14 [1] : vector<16x32xf32> to vector<16xf32>
    %20 = vector.shape_cast %19 : vector<16xf32> to vector<16x1xf32>
    %21 = arith.maximumf %11, %20 : vector<16x1xf32>
    %22 = arith.subf %11, %21 : vector<16x1xf32>
    %23 = math.exp %22 : vector<16x1xf32>
    %24 = arith.subf %20, %21 : vector<16x1xf32>
    %25 = math.exp %24 : vector<16x1xf32>
    %26 = arith.mulf %12, %23 : vector<16x1xf32>
    %27 = arith.addf %26, %25 : vector<16x1xf32>
    %c0_15 = arith.constant 0 : index
    %c0_16 = arith.constant 0 : index
    %28 = vector.load %arg2[%c0_15, %c0_16] : memref<64x64xf32, #tpu.memory_space<vmem>>, vector<16x32xf32>
    %29 = vector.broadcast %23 : vector<16x1xf32> to vector<16x32xf32>
    %30 = arith.mulf %13, %29 : vector<16x32xf32>
    %31 = vector.broadcast %25 : vector<16x1xf32> to vector<16x32xf32>
    %32 = arith.mulf %31, %28 : vector<16x32xf32>
    %33 = arith.addf %30, %32 : vector<16x32xf32>
    %34 = vector.extract_strided_slice %7 {offsets = [0, 0], sizes = [16, 32], strides = [1, 1]} : vector<64x128xf32> to vector<16x32xf32>
    %35 = arith.addf %3, %34 : vector<16x32xf32>
    %cst_17 = arith.constant dense<0.000000e+00> : vector<16xf32>
    %36 = vector.multi_reduction <add>, %35, %cst_17 [1] : vector<16x32xf32> to vector<16xf32>
    %37 = vector.shape_cast %36 : vector<16xf32> to vector<16x1xf32>
    %cst_18 = arith.constant 3.200000e+01 : f32
    %38 = vector.broadcast %cst_18 : f32 to vector<16x1xf32>
    %39 = arith.divf %37, %38 : vector<16x1xf32>
    %40 = vector.broadcast %39 : vector<16x1xf32> to vector<16x32xf32>
    %41 = arith.subf %35, %40 : vector<16x32xf32>
    %42 = arith.mulf %41, %41 : vector<16x32xf32>
    %cst_19 = arith.constant dense<0.000000e+00> : vector<16xf32>
    %43 = vector.multi_reduction <add>, %42, %cst_19 [1] : vector<16x32xf32> to vector<16xf32>
    %44 = vector.shape_cast %43 : vector<16xf32> to vector<16x1xf32>
    %cst_20 = arith.constant 3.200000e+01 : f32
    %45 = vector.broadcast %cst_20 : f32 to vector<16x1xf32>
    %46 = arith.divf %44, %45 : vector<16x1xf32>
    %47 = vector.broadcast %39 : vector<16x1xf32> to vector<16x32xf32>
    %48 = arith.subf %35, %47 : vector<16x32xf32>
    %cst_21 = arith.constant 9.99999974E-6 : f32
    %49 = vector.broadcast %cst_21 : f32 to vector<16x1xf32>
    %50 = arith.addf %46, %49 : vector<16x1xf32>
    %51 = math.rsqrt %50 : vector<16x1xf32>
    %52 = vector.broadcast %51 : vector<16x1xf32> to vector<16x32xf32>
    %53 = arith.mulf %48, %52 : vector<16x32xf32>
    %54 = vector.broadcast %9 : vector<1x32xf32> to vector<16x32xf32>
    %55 = arith.mulf %53, %54 : vector<16x32xf32>
    %56 = vector.broadcast %10 : vector<1x32xf32> to vector<16x32xf32>
    %57 = arith.addf %55, %56 : vector<16x32xf32>
    %58 = arith.negf %57 : vector<16x32xf32>
    %59 = math.exp %58 : vector<16x32xf32>
    %cst_22 = arith.constant 1.000000e+00 : f32
    %60 = vector.broadcast %cst_22 : f32 to vector<16x32xf32>
    %61 = arith.addf %60, %59 : vector<16x32xf32>
    %62 = arith.divf %60, %61 : vector<16x32xf32>
    %c0_23 = arith.constant 0 : index
    %c0_24 = arith.constant 0 : index
    %63 = vector.load %arg3[%c0_23, %c0_24] : memref<64x32xf32, #tpu.memory_space<vmem>>, vector<16x32xf32>
    %64 = arith.mulf %62, %63 : vector<16x32xf32>
    %65 = arith.addf %14, %64 : vector<16x32xf32>
    %66 = vector.extract_strided_slice %7 {offsets = [16, 32], sizes = [16, 32], strides = [1, 1]} : vector<64x128xf32> to vector<16x32xf32>
    %67 = math.tanh %66 : vector<16x32xf32>
    %68 = vector.broadcast %8 : vector<1x32xf32> to vector<16x32xf32>
    %69 = arith.mulf %67, %68 : vector<16x32xf32>
    %cst_25 = arith.constant dense<0.000000e+00> : vector<16xf32>
    %70 = vector.multi_reduction <add>, %69, %cst_25 [1] : vector<16x32xf32> to vector<16xf32>
    %71 = vector.shape_cast %70 : vector<16xf32> to vector<16x1xf32>
    %72 = arith.maximumf %21, %71 : vector<16x1xf32>
    %73 = arith.subf %21, %72 : vector<16x1xf32>
    %74 = math.exp %73 : vector<16x1xf32>
    %75 = arith.subf %71, %72 : vector<16x1xf32>
    %76 = math.exp %75 : vector<16x1xf32>
    %77 = arith.mulf %27, %74 : vector<16x1xf32>
    %78 = arith.addf %77, %76 : vector<16x1xf32>
    %c16 = arith.constant 16 : index
    %c0_26 = arith.constant 0 : index
    %79 = vector.load %arg2[%c16, %c0_26] : memref<64x64xf32, #tpu.memory_space<vmem>>, vector<16x32xf32>
    %80 = vector.broadcast %74 : vector<16x1xf32> to vector<16x32xf32>
    %81 = arith.mulf %33, %80 : vector<16x32xf32>
    %82 = vector.broadcast %76 : vector<16x1xf32> to vector<16x32xf32>
    %83 = arith.mulf %82, %79 : vector<16x32xf32>
    %84 = arith.addf %81, %83 : vector<16x32xf32>
    %85 = vector.extract_strided_slice %7 {offsets = [16, 0], sizes = [16, 32], strides = [1, 1]} : vector<64x128xf32> to vector<16x32xf32>
    %86 = arith.addf %3, %85 : vector<16x32xf32>
    %cst_27 = arith.constant dense<0.000000e+00> : vector<16xf32>
    %87 = vector.multi_reduction <add>, %86, %cst_27 [1] : vector<16x32xf32> to vector<16xf32>
    %88 = vector.shape_cast %87 : vector<16xf32> to vector<16x1xf32>
    %cst_28 = arith.constant 3.200000e+01 : f32
    %89 = vector.broadcast %cst_28 : f32 to vector<16x1xf32>
    %90 = arith.divf %88, %89 : vector<16x1xf32>
    %91 = vector.broadcast %90 : vector<16x1xf32> to vector<16x32xf32>
    %92 = arith.subf %86, %91 : vector<16x32xf32>
    %93 = arith.mulf %92, %92 : vector<16x32xf32>
    %cst_29 = arith.constant dense<0.000000e+00> : vector<16xf32>
    %94 = vector.multi_reduction <add>, %93, %cst_29 [1] : vector<16x32xf32> to vector<16xf32>
    %95 = vector.shape_cast %94 : vector<16xf32> to vector<16x1xf32>
    %cst_30 = arith.constant 3.200000e+01 : f32
    %96 = vector.broadcast %cst_30 : f32 to vector<16x1xf32>
    %97 = arith.divf %95, %96 : vector<16x1xf32>
    %98 = vector.broadcast %90 : vector<16x1xf32> to vector<16x32xf32>
    %99 = arith.subf %86, %98 : vector<16x32xf32>
    %cst_31 = arith.constant 9.99999974E-6 : f32
    %100 = vector.broadcast %cst_31 : f32 to vector<16x1xf32>
    %101 = arith.addf %97, %100 : vector<16x1xf32>
    %102 = math.rsqrt %101 : vector<16x1xf32>
    %103 = vector.broadcast %102 : vector<16x1xf32> to vector<16x32xf32>
    %104 = arith.mulf %99, %103 : vector<16x32xf32>
    %105 = vector.broadcast %9 : vector<1x32xf32> to vector<16x32xf32>
    %106 = arith.mulf %104, %105 : vector<16x32xf32>
    %107 = vector.broadcast %10 : vector<1x32xf32> to vector<16x32xf32>
    %108 = arith.addf %106, %107 : vector<16x32xf32>
    %109 = arith.negf %108 : vector<16x32xf32>
    %110 = math.exp %109 : vector<16x32xf32>
    %cst_32 = arith.constant 1.000000e+00 : f32
    %111 = vector.broadcast %cst_32 : f32 to vector<16x32xf32>
    %112 = arith.addf %111, %110 : vector<16x32xf32>
    %113 = arith.divf %111, %112 : vector<16x32xf32>
    %c16_33 = arith.constant 16 : index
    %c0_34 = arith.constant 0 : index
    %114 = vector.load %arg3[%c16_33, %c0_34] : memref<64x32xf32, #tpu.memory_space<vmem>>, vector<16x32xf32>
    %115 = arith.mulf %113, %114 : vector<16x32xf32>
    %116 = arith.addf %65, %115 : vector<16x32xf32>
    %117 = vector.extract_strided_slice %7 {offsets = [32, 32], sizes = [16, 32], strides = [1, 1]} : vector<64x128xf32> to vector<16x32xf32>
    %118 = math.tanh %117 : vector<16x32xf32>
    %119 = vector.broadcast %8 : vector<1x32xf32> to vector<16x32xf32>
    %120 = arith.mulf %118, %119 : vector<16x32xf32>
    %cst_35 = arith.constant dense<0.000000e+00> : vector<16xf32>
    %121 = vector.multi_reduction <add>, %120, %cst_35 [1] : vector<16x32xf32> to vector<16xf32>
    %122 = vector.shape_cast %121 : vector<16xf32> to vector<16x1xf32>
    %123 = arith.maximumf %72, %122 : vector<16x1xf32>
    %124 = arith.subf %72, %123 : vector<16x1xf32>
    %125 = math.exp %124 : vector<16x1xf32>
    %126 = arith.subf %122, %123 : vector<16x1xf32>
    %127 = math.exp %126 : vector<16x1xf32>
    %128 = arith.mulf %78, %125 : vector<16x1xf32>
    %129 = arith.addf %128, %127 : vector<16x1xf32>
    %c32_36 = arith.constant 32 : index
    %c0_37 = arith.constant 0 : index
    %130 = vector.load %arg2[%c32_36, %c0_37] : memref<64x64xf32, #tpu.memory_space<vmem>>, vector<16x32xf32>
    %131 = vector.broadcast %125 : vector<16x1xf32> to vector<16x32xf32>
    %132 = arith.mulf %84, %131 : vector<16x32xf32>
    %133 = vector.broadcast %127 : vector<16x1xf32> to vector<16x32xf32>
    %134 = arith.mulf %133, %130 : vector<16x32xf32>
    %135 = arith.addf %132, %134 : vector<16x32xf32>
    %136 = vector.extract_strided_slice %7 {offsets = [32, 0], sizes = [16, 32], strides = [1, 1]} : vector<64x128xf32> to vector<16x32xf32>
    %137 = arith.addf %3, %136 : vector<16x32xf32>
    %cst_38 = arith.constant dense<0.000000e+00> : vector<16xf32>
    %138 = vector.multi_reduction <add>, %137, %cst_38 [1] : vector<16x32xf32> to vector<16xf32>
    %139 = vector.shape_cast %138 : vector<16xf32> to vector<16x1xf32>
    %cst_39 = arith.constant 3.200000e+01 : f32
    %140 = vector.broadcast %cst_39 : f32 to vector<16x1xf32>
    %141 = arith.divf %139, %140 : vector<16x1xf32>
    %142 = vector.broadcast %141 : vector<16x1xf32> to vector<16x32xf32>
    %143 = arith.subf %137, %142 : vector<16x32xf32>
    %144 = arith.mulf %143, %143 : vector<16x32xf32>
    %cst_40 = arith.constant dense<0.000000e+00> : vector<16xf32>
    %145 = vector.multi_reduction <add>, %144, %cst_40 [1] : vector<16x32xf32> to vector<16xf32>
    %146 = vector.shape_cast %145 : vector<16xf32> to vector<16x1xf32>
    %cst_41 = arith.constant 3.200000e+01 : f32
    %147 = vector.broadcast %cst_41 : f32 to vector<16x1xf32>
    %148 = arith.divf %146, %147 : vector<16x1xf32>
    %149 = vector.broadcast %141 : vector<16x1xf32> to vector<16x32xf32>
    %150 = arith.subf %137, %149 : vector<16x32xf32>
    %cst_42 = arith.constant 9.99999974E-6 : f32
    %151 = vector.broadcast %cst_42 : f32 to vector<16x1xf32>
    %152 = arith.addf %148, %151 : vector<16x1xf32>
    %153 = math.rsqrt %152 : vector<16x1xf32>
    %154 = vector.broadcast %153 : vector<16x1xf32> to vector<16x32xf32>
    %155 = arith.mulf %150, %154 : vector<16x32xf32>
    %156 = vector.broadcast %9 : vector<1x32xf32> to vector<16x32xf32>
    %157 = arith.mulf %155, %156 : vector<16x32xf32>
    %158 = vector.broadcast %10 : vector<1x32xf32> to vector<16x32xf32>
    %159 = arith.addf %157, %158 : vector<16x32xf32>
    %160 = arith.negf %159 : vector<16x32xf32>
    %161 = math.exp %160 : vector<16x32xf32>
    %cst_43 = arith.constant 1.000000e+00 : f32
    %162 = vector.broadcast %cst_43 : f32 to vector<16x32xf32>
    %163 = arith.addf %162, %161 : vector<16x32xf32>
    %164 = arith.divf %162, %163 : vector<16x32xf32>
    %c32_44 = arith.constant 32 : index
    %c0_45 = arith.constant 0 : index
    %165 = vector.load %arg3[%c32_44, %c0_45] : memref<64x32xf32, #tpu.memory_space<vmem>>, vector<16x32xf32>
    %166 = arith.mulf %164, %165 : vector<16x32xf32>
    %167 = arith.addf %116, %166 : vector<16x32xf32>
    %168 = vector.extract_strided_slice %7 {offsets = [48, 32], sizes = [16, 32], strides = [1, 1]} : vector<64x128xf32> to vector<16x32xf32>
    %169 = math.tanh %168 : vector<16x32xf32>
    %170 = vector.broadcast %8 : vector<1x32xf32> to vector<16x32xf32>
    %171 = arith.mulf %169, %170 : vector<16x32xf32>
    %cst_46 = arith.constant dense<0.000000e+00> : vector<16xf32>
    %172 = vector.multi_reduction <add>, %171, %cst_46 [1] : vector<16x32xf32> to vector<16xf32>
    %173 = vector.shape_cast %172 : vector<16xf32> to vector<16x1xf32>
    %174 = arith.maximumf %123, %173 : vector<16x1xf32>
    %175 = arith.subf %123, %174 : vector<16x1xf32>
    %176 = math.exp %175 : vector<16x1xf32>
    %177 = arith.subf %173, %174 : vector<16x1xf32>
    %178 = math.exp %177 : vector<16x1xf32>
    %179 = arith.mulf %129, %176 : vector<16x1xf32>
    %180 = arith.addf %179, %178 : vector<16x1xf32>
    %c48 = arith.constant 48 : index
    %c0_47 = arith.constant 0 : index
    %181 = vector.load %arg2[%c48, %c0_47] : memref<64x64xf32, #tpu.memory_space<vmem>>, vector<16x32xf32>
    %182 = vector.broadcast %176 : vector<16x1xf32> to vector<16x32xf32>
    %183 = arith.mulf %135, %182 : vector<16x32xf32>
    %184 = vector.broadcast %178 : vector<16x1xf32> to vector<16x32xf32>
    %185 = arith.mulf %184, %181 : vector<16x32xf32>
    %186 = arith.addf %183, %185 : vector<16x32xf32>
    %187 = vector.extract_strided_slice %7 {offsets = [48, 0], sizes = [16, 32], strides = [1, 1]} : vector<64x128xf32> to vector<16x32xf32>
    %188 = arith.addf %3, %187 : vector<16x32xf32>
    %cst_48 = arith.constant dense<0.000000e+00> : vector<16xf32>
    %189 = vector.multi_reduction <add>, %188, %cst_48 [1] : vector<16x32xf32> to vector<16xf32>
    %190 = vector.shape_cast %189 : vector<16xf32> to vector<16x1xf32>
    %cst_49 = arith.constant 3.200000e+01 : f32
    %191 = vector.broadcast %cst_49 : f32 to vector<16x1xf32>
    %192 = arith.divf %190, %191 : vector<16x1xf32>
    %193 = vector.broadcast %192 : vector<16x1xf32> to vector<16x32xf32>
    %194 = arith.subf %188, %193 : vector<16x32xf32>
    %195 = arith.mulf %194, %194 : vector<16x32xf32>
    %cst_50 = arith.constant dense<0.000000e+00> : vector<16xf32>
    %196 = vector.multi_reduction <add>, %195, %cst_50 [1] : vector<16x32xf32> to vector<16xf32>
    %197 = vector.shape_cast %196 : vector<16xf32> to vector<16x1xf32>
    %cst_51 = arith.constant 3.200000e+01 : f32
    %198 = vector.broadcast %cst_51 : f32 to vector<16x1xf32>
    %199 = arith.divf %197, %198 : vector<16x1xf32>
    %200 = vector.broadcast %192 : vector<16x1xf32> to vector<16x32xf32>
    %201 = arith.subf %188, %200 : vector<16x32xf32>
    %cst_52 = arith.constant 9.99999974E-6 : f32
    %202 = vector.broadcast %cst_52 : f32 to vector<16x1xf32>
    %203 = arith.addf %199, %202 : vector<16x1xf32>
    %204 = math.rsqrt %203 : vector<16x1xf32>
    %205 = vector.broadcast %204 : vector<16x1xf32> to vector<16x32xf32>
    %206 = arith.mulf %201, %205 : vector<16x32xf32>
    %207 = vector.broadcast %9 : vector<1x32xf32> to vector<16x32xf32>
    %208 = arith.mulf %206, %207 : vector<16x32xf32>
    %209 = vector.broadcast %10 : vector<1x32xf32> to vector<16x32xf32>
    %210 = arith.addf %208, %209 : vector<16x32xf32>
    %211 = arith.negf %210 : vector<16x32xf32>
    %212 = math.exp %211 : vector<16x32xf32>
    %cst_53 = arith.constant 1.000000e+00 : f32
    %213 = vector.broadcast %cst_53 : f32 to vector<16x32xf32>
    %214 = arith.addf %213, %212 : vector<16x32xf32>
    %215 = arith.divf %213, %214 : vector<16x32xf32>
    %c48_54 = arith.constant 48 : index
    %c0_55 = arith.constant 0 : index
    %216 = vector.load %arg3[%c48_54, %c0_55] : memref<64x32xf32, #tpu.memory_space<vmem>>, vector<16x32xf32>
    %217 = arith.mulf %215, %216 : vector<16x32xf32>
    %218 = arith.addf %167, %217 : vector<16x32xf32>
    %219 = tpu.reciprocal %180 {approx = true} : vector<16x1xf32> -> vector<16x1xf32>
    %220 = vector.broadcast %219 : vector<16x1xf32> to vector<16x32xf32>
    %221 = arith.mulf %186, %220 : vector<16x32xf32>
    %c0_56 = arith.constant 0 : index
    %c0_57 = arith.constant 0 : index
    %222 = vector.load %arg6[%c0_56, %c0_57] : memref<32x128xf32, #tpu.memory_space<vmem>>, vector<32x32xf32>
    %cst_58 = arith.constant dense<0.000000e+00> : vector<16x32xf32>
    %223 = tpu.matmul %221, %222, %cst_58 {dimension_numbers = #tpu.dot_dimension_numbers<[1], [0], [0], [1], [0, 0, 1, 1], [], []>} : vector<16x32xf32>, vector<32x32xf32>, vector<16x32xf32> -> vector<16x32xf32>
    %c0_59 = arith.constant 0 : index
    %c0_60 = arith.constant 0 : index
    %224 = vector.load %arg7[%c0_59, %c0_60] : memref<12x32xf32, #tpu.memory_space<vmem>>, vector<1x32xf32>
    %c1 = arith.constant 1 : index
    %c0_61 = arith.constant 0 : index
    %225 = vector.load %arg7[%c1, %c0_61] : memref<12x32xf32, #tpu.memory_space<vmem>>, vector<1x32xf32>
    %cst_62 = arith.constant dense<0.000000e+00> : vector<16xf32>
    %226 = vector.multi_reduction <add>, %223, %cst_62 [1] : vector<16x32xf32> to vector<16xf32>
    %227 = vector.shape_cast %226 : vector<16xf32> to vector<16x1xf32>
    %cst_63 = arith.constant 3.200000e+01 : f32
    %228 = vector.broadcast %cst_63 : f32 to vector<16x1xf32>
    %229 = arith.divf %227, %228 : vector<16x1xf32>
    %230 = vector.broadcast %229 : vector<16x1xf32> to vector<16x32xf32>
    %231 = arith.subf %223, %230 : vector<16x32xf32>
    %232 = arith.mulf %231, %231 : vector<16x32xf32>
    %cst_64 = arith.constant dense<0.000000e+00> : vector<16xf32>
    %233 = vector.multi_reduction <add>, %232, %cst_64 [1] : vector<16x32xf32> to vector<16xf32>
    %234 = vector.shape_cast %233 : vector<16xf32> to vector<16x1xf32>
    %cst_65 = arith.constant 3.200000e+01 : f32
    %235 = vector.broadcast %cst_65 : f32 to vector<16x1xf32>
    %236 = arith.divf %234, %235 : vector<16x1xf32>
    %237 = vector.broadcast %229 : vector<16x1xf32> to vector<16x32xf32>
    %238 = arith.subf %223, %237 : vector<16x32xf32>
    %cst_66 = arith.constant 9.99999974E-6 : f32
    %239 = vector.broadcast %cst_66 : f32 to vector<16x1xf32>
    %240 = arith.addf %236, %239 : vector<16x1xf32>
    %241 = math.rsqrt %240 : vector<16x1xf32>
    %242 = vector.broadcast %241 : vector<16x1xf32> to vector<16x32xf32>
    %243 = arith.mulf %238, %242 : vector<16x32xf32>
    %244 = vector.broadcast %224 : vector<1x32xf32> to vector<16x32xf32>
    %245 = arith.mulf %243, %244 : vector<16x32xf32>
    %246 = vector.broadcast %225 : vector<1x32xf32> to vector<16x32xf32>
    %247 = arith.addf %245, %246 : vector<16x32xf32>
    %248 = math.tanh %247 : vector<16x32xf32>
    %c0_67 = arith.constant 0 : index
    %c32_68 = arith.constant 32 : index
    %249 = vector.load %arg6[%c0_67, %c32_68] : memref<32x128xf32, #tpu.memory_space<vmem>>, vector<32x96xf32>
    %cst_69 = arith.constant dense<0.000000e+00> : vector<16x96xf32>
    %250 = tpu.matmul %248, %249, %cst_69 {dimension_numbers = #tpu.dot_dimension_numbers<[1], [0], [0], [1], [0, 0, 1, 1], [], []>} : vector<16x32xf32>, vector<32x96xf32>, vector<16x96xf32> -> vector<16x96xf32>
    %251 = arith.addf %4, %250 : vector<16x96xf32>
    %252 = vector.extract_strided_slice %251 {offsets = [0, 0], sizes = [16, 32], strides = [1, 1]} : vector<16x96xf32> to vector<16x32xf32>
    %c4 = arith.constant 4 : index
    %c0_70 = arith.constant 0 : index
    %253 = vector.load %arg7[%c4, %c0_70] : memref<12x32xf32, #tpu.memory_space<vmem>>, vector<1x32xf32>
    %c5 = arith.constant 5 : index
    %c0_71 = arith.constant 0 : index
    %254 = vector.load %arg7[%c5, %c0_71] : memref<12x32xf32, #tpu.memory_space<vmem>>, vector<1x32xf32>
    %cst_72 = arith.constant dense<0.000000e+00> : vector<16xf32>
    %255 = vector.multi_reduction <add>, %252, %cst_72 [1] : vector<16x32xf32> to vector<16xf32>
    %256 = vector.shape_cast %255 : vector<16xf32> to vector<16x1xf32>
    %cst_73 = arith.constant 3.200000e+01 : f32
    %257 = vector.broadcast %cst_73 : f32 to vector<16x1xf32>
    %258 = arith.divf %256, %257 : vector<16x1xf32>
    %259 = vector.broadcast %258 : vector<16x1xf32> to vector<16x32xf32>
    %260 = arith.subf %252, %259 : vector<16x32xf32>
    %261 = arith.mulf %260, %260 : vector<16x32xf32>
    %cst_74 = arith.constant dense<0.000000e+00> : vector<16xf32>
    %262 = vector.multi_reduction <add>, %261, %cst_74 [1] : vector<16x32xf32> to vector<16xf32>
    %263 = vector.shape_cast %262 : vector<16xf32> to vector<16x1xf32>
    %cst_75 = arith.constant 3.200000e+01 : f32
    %264 = vector.broadcast %cst_75 : f32 to vector<16x1xf32>
    %265 = arith.divf %263, %264 : vector<16x1xf32>
    %266 = vector.broadcast %258 : vector<16x1xf32> to vector<16x32xf32>
    %267 = arith.subf %252, %266 : vector<16x32xf32>
    %cst_76 = arith.constant 9.99999974E-6 : f32
    %268 = vector.broadcast %cst_76 : f32 to vector<16x1xf32>
    %269 = arith.addf %265, %268 : vector<16x1xf32>
    %270 = math.rsqrt %269 : vector<16x1xf32>
    %271 = vector.broadcast %270 : vector<16x1xf32> to vector<16x32xf32>
    %272 = arith.mulf %267, %271 : vector<16x32xf32>
    %273 = vector.broadcast %253 : vector<1x32xf32> to vector<16x32xf32>
    %274 = arith.mulf %272, %273 : vector<16x32xf32>
    %275 = vector.broadcast %254 : vector<1x32xf32> to vector<16x32xf32>
    %276 = arith.addf %274, %275 : vector<16x32xf32>
    %277 = arith.negf %276 : vector<16x32xf32>
    %278 = math.exp %277 : vector<16x32xf32>
    %cst_77 = arith.constant 1.000000e+00 : f32
    %279 = vector.broadcast %cst_77 : f32 to vector<16x32xf32>
    %280 = arith.addf %279, %278 : vector<16x32xf32>
    %281 = arith.divf %279, %280 : vector<16x32xf32>
    %282 = vector.extract_strided_slice %251 {offsets = [0, 32], sizes = [16, 32], strides = [1, 1]} : vector<16x96xf32> to vector<16x32xf32>
    %c6 = arith.constant 6 : index
    %c0_78 = arith.constant 0 : index
    %283 = vector.load %arg7[%c6, %c0_78] : memref<12x32xf32, #tpu.memory_space<vmem>>, vector<1x32xf32>
    %c7 = arith.constant 7 : index
    %c0_79 = arith.constant 0 : index
    %284 = vector.load %arg7[%c7, %c0_79] : memref<12x32xf32, #tpu.memory_space<vmem>>, vector<1x32xf32>
    %cst_80 = arith.constant dense<0.000000e+00> : vector<16xf32>
    %285 = vector.multi_reduction <add>, %282, %cst_80 [1] : vector<16x32xf32> to vector<16xf32>
    %286 = vector.shape_cast %285 : vector<16xf32> to vector<16x1xf32>
    %cst_81 = arith.constant 3.200000e+01 : f32
    %287 = vector.broadcast %cst_81 : f32 to vector<16x1xf32>
    %288 = arith.divf %286, %287 : vector<16x1xf32>
    %289 = vector.broadcast %288 : vector<16x1xf32> to vector<16x32xf32>
    %290 = arith.subf %282, %289 : vector<16x32xf32>
    %291 = arith.mulf %290, %290 : vector<16x32xf32>
    %cst_82 = arith.constant dense<0.000000e+00> : vector<16xf32>
    %292 = vector.multi_reduction <add>, %291, %cst_82 [1] : vector<16x32xf32> to vector<16xf32>
    %293 = vector.shape_cast %292 : vector<16xf32> to vector<16x1xf32>
    %cst_83 = arith.constant 3.200000e+01 : f32
    %294 = vector.broadcast %cst_83 : f32 to vector<16x1xf32>
    %295 = arith.divf %293, %294 : vector<16x1xf32>
    %296 = vector.broadcast %288 : vector<16x1xf32> to vector<16x32xf32>
    %297 = arith.subf %282, %296 : vector<16x32xf32>
    %cst_84 = arith.constant 9.99999974E-6 : f32
    %298 = vector.broadcast %cst_84 : f32 to vector<16x1xf32>
    %299 = arith.addf %295, %298 : vector<16x1xf32>
    %300 = math.rsqrt %299 : vector<16x1xf32>
    %301 = vector.broadcast %300 : vector<16x1xf32> to vector<16x32xf32>
    %302 = arith.mulf %297, %301 : vector<16x32xf32>
    %303 = vector.broadcast %283 : vector<1x32xf32> to vector<16x32xf32>
    %304 = arith.mulf %302, %303 : vector<16x32xf32>
    %305 = vector.broadcast %284 : vector<1x32xf32> to vector<16x32xf32>
    %306 = arith.addf %304, %305 : vector<16x32xf32>
    %307 = arith.negf %306 : vector<16x32xf32>
    %308 = math.exp %307 : vector<16x32xf32>
    %cst_85 = arith.constant 1.000000e+00 : f32
    %309 = vector.broadcast %cst_85 : f32 to vector<16x32xf32>
    %310 = arith.addf %309, %308 : vector<16x32xf32>
    %311 = arith.divf %309, %310 : vector<16x32xf32>
    %312 = vector.extract_strided_slice %251 {offsets = [0, 64], sizes = [16, 32], strides = [1, 1]} : vector<16x96xf32> to vector<16x32xf32>
    %c8 = arith.constant 8 : index
    %c0_86 = arith.constant 0 : index
    %313 = vector.load %arg7[%c8, %c0_86] : memref<12x32xf32, #tpu.memory_space<vmem>>, vector<1x32xf32>
    %c9 = arith.constant 9 : index
    %c0_87 = arith.constant 0 : index
    %314 = vector.load %arg7[%c9, %c0_87] : memref<12x32xf32, #tpu.memory_space<vmem>>, vector<1x32xf32>
    %cst_88 = arith.constant dense<0.000000e+00> : vector<16xf32>
    %315 = vector.multi_reduction <add>, %312, %cst_88 [1] : vector<16x32xf32> to vector<16xf32>
    %316 = vector.shape_cast %315 : vector<16xf32> to vector<16x1xf32>
    %cst_89 = arith.constant 3.200000e+01 : f32
    %317 = vector.broadcast %cst_89 : f32 to vector<16x1xf32>
    %318 = arith.divf %316, %317 : vector<16x1xf32>
    %319 = vector.broadcast %318 : vector<16x1xf32> to vector<16x32xf32>
    %320 = arith.subf %312, %319 : vector<16x32xf32>
    %321 = arith.mulf %320, %320 : vector<16x32xf32>
    %cst_90 = arith.constant dense<0.000000e+00> : vector<16xf32>
    %322 = vector.multi_reduction <add>, %321, %cst_90 [1] : vector<16x32xf32> to vector<16xf32>
    %323 = vector.shape_cast %322 : vector<16xf32> to vector<16x1xf32>
    %cst_91 = arith.constant 3.200000e+01 : f32
    %324 = vector.broadcast %cst_91 : f32 to vector<16x1xf32>
    %325 = arith.divf %323, %324 : vector<16x1xf32>
    %326 = vector.broadcast %318 : vector<16x1xf32> to vector<16x32xf32>
    %327 = arith.subf %312, %326 : vector<16x32xf32>
    %cst_92 = arith.constant 9.99999974E-6 : f32
    %328 = vector.broadcast %cst_92 : f32 to vector<16x1xf32>
    %329 = arith.addf %325, %328 : vector<16x1xf32>
    %330 = math.rsqrt %329 : vector<16x1xf32>
    %331 = vector.broadcast %330 : vector<16x1xf32> to vector<16x32xf32>
    %332 = arith.mulf %327, %331 : vector<16x32xf32>
    %333 = vector.broadcast %313 : vector<1x32xf32> to vector<16x32xf32>
    %334 = arith.mulf %332, %333 : vector<16x32xf32>
    %335 = vector.broadcast %314 : vector<1x32xf32> to vector<16x32xf32>
    %336 = arith.addf %334, %335 : vector<16x32xf32>
    %337 = math.tanh %336 : vector<16x32xf32>
    %338 = arith.mulf %281, %337 : vector<16x32xf32>
    %339 = arith.addf %338, %218 : vector<16x32xf32>
    %c10 = arith.constant 10 : index
    %c0_93 = arith.constant 0 : index
    %340 = vector.load %arg7[%c10, %c0_93] : memref<12x32xf32, #tpu.memory_space<vmem>>, vector<1x32xf32>
    %c11 = arith.constant 11 : index
    %c0_94 = arith.constant 0 : index
    %341 = vector.load %arg7[%c11, %c0_94] : memref<12x32xf32, #tpu.memory_space<vmem>>, vector<1x32xf32>
    %cst_95 = arith.constant dense<0.000000e+00> : vector<16xf32>
    %342 = vector.multi_reduction <add>, %339, %cst_95 [1] : vector<16x32xf32> to vector<16xf32>
    %343 = vector.shape_cast %342 : vector<16xf32> to vector<16x1xf32>
    %cst_96 = arith.constant 3.200000e+01 : f32
    %344 = vector.broadcast %cst_96 : f32 to vector<16x1xf32>
    %345 = arith.divf %343, %344 : vector<16x1xf32>
    %346 = vector.broadcast %345 : vector<16x1xf32> to vector<16x32xf32>
    %347 = arith.subf %339, %346 : vector<16x32xf32>
    %348 = arith.mulf %347, %347 : vector<16x32xf32>
    %cst_97 = arith.constant dense<0.000000e+00> : vector<16xf32>
    %349 = vector.multi_reduction <add>, %348, %cst_97 [1] : vector<16x32xf32> to vector<16xf32>
    %350 = vector.shape_cast %349 : vector<16xf32> to vector<16x1xf32>
    %cst_98 = arith.constant 3.200000e+01 : f32
    %351 = vector.broadcast %cst_98 : f32 to vector<16x1xf32>
    %352 = arith.divf %350, %351 : vector<16x1xf32>
    %353 = vector.broadcast %345 : vector<16x1xf32> to vector<16x32xf32>
    %354 = arith.subf %339, %353 : vector<16x32xf32>
    %cst_99 = arith.constant 9.99999974E-6 : f32
    %355 = vector.broadcast %cst_99 : f32 to vector<16x1xf32>
    %356 = arith.addf %352, %355 : vector<16x1xf32>
    %357 = math.rsqrt %356 : vector<16x1xf32>
    %358 = vector.broadcast %357 : vector<16x1xf32> to vector<16x32xf32>
    %359 = arith.mulf %354, %358 : vector<16x32xf32>
    %360 = vector.broadcast %340 : vector<1x32xf32> to vector<16x32xf32>
    %361 = arith.mulf %359, %360 : vector<16x32xf32>
    %362 = vector.broadcast %341 : vector<1x32xf32> to vector<16x32xf32>
    %363 = arith.addf %361, %362 : vector<16x32xf32>
    %364 = math.tanh %363 : vector<16x32xf32>
    %365 = arith.mulf %311, %364 : vector<16x32xf32>
    %366 = tpu.concatenate %365, %363 in 1 : vector<16x32xf32>, vector<16x32xf32> -> vector<16x64xf32>
    %c0_100 = arith.constant 0 : index
    %c0_101 = arith.constant 0 : index
    %367 = vector.load %arg8[%c0_100, %c0_101] : memref<16x64xf32, #tpu.memory_space<vmem>>, vector<16x64xf32>
    tpu.vector_store %arg8[%c0_100, %c0_101], %366 {strides = array<i32>} : memref<16x64xf32, #tpu.memory_space<vmem>>, vector<16x64xf32>,
    return
  }
  func.func @transform_0(%arg0: i32) -> (i32, i32) {
    %c0_i32 = arith.constant 0 : i32
    %c0_i32_0 = arith.constant 0 : i32
    return %arg0, %c0_i32 : i32, i32
  }
  func.func @transform_1(%arg0: i32) -> (i32, i32) {
    %c0_i32 = arith.constant 0 : i32
    %c0_i32_0 = arith.constant 0 : i32
    return %arg0, %c0_i32 : i32, i32
  }
  func.func @transform_2(%arg0: i32) -> (i32, i32) {
    %c0_i32 = arith.constant 0 : i32
    %c0_i32_0 = arith.constant 0 : i32
    return %arg0, %c0_i32 : i32, i32
  }
  func.func @transform_3(%arg0: i32) -> (i32, i32) {
    %c0_i32 = arith.constant 0 : i32
    %c0_i32_0 = arith.constant 0 : i32
    %c0_i32_1 = arith.constant 0 : i32
    return %c0_i32, %c0_i32_0 : i32, i32
  }
  func.func @transform_4(%arg0: i32) -> (i32, i32) {
    %c0_i32 = arith.constant 0 : i32
    %c0_i32_0 = arith.constant 0 : i32
    %c0_i32_1 = arith.constant 0 : i32
    return %c0_i32, %c0_i32_0 : i32, i32
  }
  func.func @transform_5(%arg0: i32) -> (i32, i32) {
    %c0_i32 = arith.constant 0 : i32
    %c0_i32_0 = arith.constant 0 : i32
    %c0_i32_1 = arith.constant 0 : i32
    return %c0_i32, %c0_i32_0 : i32, i32
  }
  func.func @transform_6(%arg0: i32) -> (i32, i32) {
    %c0_i32 = arith.constant 0 : i32
    %c0_i32_0 = arith.constant 0 : i32
    %c0_i32_1 = arith.constant 0 : i32
    return %c0_i32, %c0_i32_0 : i32, i32
  }
  func.func @transform_7(%arg0: i32) -> (i32, i32) {
    %c0_i32 = arith.constant 0 : i32
    %c0_i32_0 = arith.constant 0 : i32
    return %arg0, %c0_i32 : i32, i32
  }
}

</mosaic_0001>

<llo_original>
// kernel: tpu_custom_call.1
$region0: #{tpu_custom_call.1}
  #allocation0 [shape = 'u32[]', space=smem, size = 0x4, offset = 0x4, fixed_abs, tag = 'smem constant byte address 0x4 - core index']
  #allocation1 [shape = 'u32[72,128]{1,0:T(1,128)}', space=vmem, size = 0x9000, scoped, tag = 'internal scratch']
  %s0 = inlined_call_operand.vmem [shape: f32[16,32], index: 0, kind: input, shape index: {}]
  %s1 = inlined_call_operand.hbm [shape: f32[64,64], index: 1, kind: input, shape index: {}]
  %s2 = inlined_call_operand.vmem [shape: f32[64,32], index: 2, kind: input, shape index: {}]
  %s3 = inlined_call_operand.hbm [shape: f32[32,128], index: 3, kind: input, shape index: {}]
  %s4 = inlined_call_operand.vmem [shape: f32[65,128], index: 4, kind: input, shape index: {}]
  %s5 = inlined_call_operand.hbm [shape: f32[32,128], index: 5, kind: input, shape index: {}]
  %s6 = inlined_call_operand.hbm [shape: f32[12,32], index: 6, kind: input, shape index: {}]
  %s7 = inlined_call_operand.hbm [shape: f32[16,64], index: 7, kind: output, shape index: {}]
  %s8 = sld [smem:[#allocation0]]
  $region54: #{tpu_custom_call.1} parent=0
    _
  %s10 = ssub.s32 1, %s8
  %s11 = scalar_select 0, %s10, %s8
  $region1: #{tpu_custom_call.1} parent=0
    #allocation2 [shape = 'u8[32768]{0}', space=vmem, size = 0x8000, scoped, tag = 'input window, operand 1, single buffered']
    #allocation3 [shape = 's32[1]{0}', space=sflag, size = 0x4, scoped, tag = 'scoped memory for tpu_custom_call.1']
    #allocation4 [shape = 's32[1]{0}', space=sflag, size = 0x4, scoped, tag = 'scoped memory for tpu_custom_call.1']
    #allocation5 [shape = 'u8[16384]{0}', space=vmem, size = 0x4000, scoped, tag = 'input window, operand 3, single buffered']
    #allocation6 [shape = 's32[1]{0}', space=sflag, size = 0x4, scoped, tag = 'scoped memory for tpu_custom_call.1']
    #allocation7 [shape = 'u8[16384]{0}', space=vmem, size = 0x4000, scoped, tag = 'input window, operand 5, single buffered']
    #allocation8 [shape = 'u8[8192]{0}', space=vmem, size = 0x2000, scoped, tag = 'input window, operand 6, single buffered']
    #allocation9 [shape = 's32[1]{0}', space=sflag, size = 0x4, scoped, tag = 'scoped memory for tpu_custom_call.1']
    #allocation10 [shape = 'u8[8192]{0}', space=vmem, size = 0x2000, scoped, tag = 'output window, operand 0, single buffered']
    %12 = vsyncpa [#allocation3], 0
    %13 = vsyncpa [#allocation6], 0
    %14 = vsyncpa [#allocation9], 0
    %15 = vsyncpa [#allocation4], 0
    // Predicated region
    $region2: #{tpu_custom_call.1} parent=1 // pred_check
      _
    $region3: #{tpu_custom_call.1} parent=1 // pred_check_branch
      %17 = sbr.rel (0) target = $region5
    $region4: #{tpu_custom_call.1} parent=1 // pred_region
      _
    $region5: #{tpu_custom_call.1} parent=1 // pred_fallthru
      _
    // Predicated region
    $region6: #{tpu_custom_call.1} parent=1 // pred_check
      _
    $region7: #{tpu_custom_call.1} parent=1 // pred_check_branch
      %19 = sbr.rel (0) target = $region9
    $region8: #{tpu_custom_call.1} parent=1 // pred_region
      %21 = vsyncadd [#allocation3], 0
      %s22 = sshll.u32 %s1, 4
      %s23 = int_to_ptr.hbm [resolvable:$true] %s22
      %s24 = sshll.u32 [#allocation2], 4
      %s25 = int_to_ptr.vmem [resolvable:$true] %s24
      %30 = dma.hbm_to_vmem [thread:$0]  %s23, 1024, %s25, [#allocation3], 128, 128, 8
    $region9: #{tpu_custom_call.1} parent=1 // pred_fallthru
      _
    // Predicated region
    $region10: #{tpu_custom_call.1} parent=1 // pred_check
      _
    $region11: #{tpu_custom_call.1} parent=1 // pred_check_branch
      %32 = sbr.rel (0) target = $region13
    $region12: #{tpu_custom_call.1} parent=1 // pred_region
      _
    $region13: #{tpu_custom_call.1} parent=1 // pred_fallthru
      _
    // Predicated region
    $region14: #{tpu_custom_call.1} parent=1 // pred_check
      _
    $region15: #{tpu_custom_call.1} parent=1 // pred_check_branch
      %34 = sbr.rel (0) target = $region17
    $region16: #{tpu_custom_call.1} parent=1 // pred_region
      %36 = vsyncadd [#allocation6], 0
      %s37 = sshll.u32 %s3, 4
      %s38 = int_to_ptr.hbm [resolvable:$true] %s37
      %s39 = sshll.u32 [#allocation5], 4
      %s40 = int_to_ptr.vmem [resolvable:$true] %s39
      %45 = dma.hbm_to_vmem [thread:$0]  %s38, 512, %s40, [#allocation6], 128, 128, 8
    $region17: #{tpu_custom_call.1} parent=1 // pred_fallthru
      _
    // Predicated region
    $region18: #{tpu_custom_call.1} parent=1 // pred_check
      _
    $region19: #{tpu_custom_call.1} parent=1 // pred_check_branch
      %47 = sbr.rel (0) target = $region21
    $region20: #{tpu_custom_call.1} parent=1 // pred_region
      _
    $region21: #{tpu_custom_call.1} parent=1 // pred_fallthru
      _
    // Predicated region
    $region22: #{tpu_custom_call.1} parent=1 // pred_check
      _
    $region23: #{tpu_custom_call.1} parent=1 // pred_check_branch
      %49 = sbr.rel (0) target = $region25
    $region24: #{tpu_custom_call.1} parent=1 // pred_region
      %51 = vsyncadd [#allocation6], 0
      %s52 = sshll.u32 %s5, 4
      %s53 = int_to_ptr.hbm [resolvable:$true] %s52
      %s54 = sshll.u32 [#allocation7], 4
      %s55 = int_to_ptr.vmem [resolvable:$true] %s54
      %60 = dma.hbm_to_vmem [thread:$0]  %s53, 512, %s55, [#allocation6], 128, 128, 8
    $region25: #{tpu_custom_call.1} parent=1 // pred_fallthru
      _
    // Predicated region
    $region26: #{tpu_custom_call.1} parent=1 // pred_check
      _
    $region27: #{tpu_custom_call.1} parent=1 // pred_check_branch
      %62 = sbr.rel (0) target = $region29
    $region28: #{tpu_custom_call.1} parent=1 // pred_region
      %64 = vsyncadd [#allocation9], 0
      %s65 = sshll.u32 %s6, 4
      %s66 = int_to_ptr.hbm [resolvable:$true] %s65
      %s67 = sshll.u32 [#allocation8], 4
      %s68 = int_to_ptr.vmem [resolvable:$true] %s67
      %73 = dma.hbm_to_vmem [thread:$0]  %s66, 256, %s68, [#allocation9], 128, 128, 8
    $region29: #{tpu_custom_call.1} parent=1 // pred_fallthru
      _
    // Predicated region
    $region30: #{tpu_custom_call.1} parent=1 // pred_check
      _
    $region31: #{tpu_custom_call.1} parent=1 // pred_check_branch
      %75 = sbr.rel (0) target = $region33
    $region32: #{tpu_custom_call.1} parent=1 // pred_region
      %77 = dma.done [#allocation3], 1024
    $region33: #{tpu_custom_call.1} parent=1 // pred_fallthru
      _
    // Predicated region
    $region34: #{tpu_custom_call.1} parent=1 // pred_check
      _
    $region35: #{tpu_custom_call.1} parent=1 // pred_check_branch
      %79 = sbr.rel (0) target = $region37
    $region36: #{tpu_custom_call.1} parent=1 // pred_region
      %81 = dma.done [#allocation6], 512
    $region37: #{tpu_custom_call.1} parent=1 // pred_fallthru
      _
    // Predicated region
    $region38: #{tpu_custom_call.1} parent=1 // pred_check
      _
    $region39: #{tpu_custom_call.1} parent=1 // pred_check_branch
      %83 = sbr.rel (0) target = $region41
    $region40: #{tpu_custom_call.1} parent=1 // pred_region
      %85 = dma.done [#allocation6], 512
    $region41: #{tpu_custom_call.1} parent=1 // pred_fallthru
      _
    // Predicated region
    $region42: #{tpu_custom_call.1} parent=1 // pred_check
      _
    $region43: #{tpu_custom_call.1} parent=1 // pred_check_branch
      %87 = sbr.rel (0) target = $region45
    $region44: #{tpu_custom_call.1} parent=1 // pred_region
      %89 = dma.done [#allocation9], 256
    $region45: #{tpu_custom_call.1} parent=1 // pred_fallthru
      _
    %v90 = vld [vmem:[%s0] sm:$0xff]
    %v91 = vld [vmem:[%s0 + $0x8] sm:$0xff]
    %v92 = vld [vmem:[#allocation5] sm:$0xff]
    %v93 = vld [vmem:[#allocation5 + $0x8] sm:$0xff]
    %v94 = vld [vmem:[#allocation5 + $0x10] sm:$0xff]
    %v95 = vld [vmem:[#allocation5 + $0x18] sm:$0xff]
    %vm96 = vcmask 261120
    %v98 = vsel %vm96, %v90, 0
    %v101 = vsel %vm96, %v91, 0
    %103 = vmatpush.msra.mxu0 0.0
    %104 = vmatpush.msra.mxu0 0.0
    %105 = vmatpush.msra.mxu0 0.0
    %106 = vmatpush.msra.mxu0 0.0
    %107 = vmatpush.msra.mxu0 0.0
    %108 = vmatpush.msra.mxu0 0.0
    %109 = vmatpush.msra.mxu0 0.0
    %110 = vmatpush.msra.mxu0 0.0
    %111 = vmatpush.msra.mxu0 0.0
    %112 = vmatpush.msra.mxu0 0.0
    %113 = vmatpush.msra.mxu0 0.0
    %114 = vmatpush.msra.mxu0 0.0
    %115 = vmatpush.msra.mxu0 %v95
    %116 = vmatpush.msra.mxu0 %v94
    %117 = vmatpush.msra.mxu0 %v93
    %118 = vmatpush.msra.mxu0 %v92
    %119 = vmatmul.f32.gmra.mxu0 %v98
    %v120 = vpop.f32.mrf.mxu0
    %v121 = vadd.f32 0.0, %v120
    %122 = vmatmul.f32.gmra.mxu0 %v101
    %v123 = vpop.f32.mrf.mxu0
    %v124 = vadd.f32 0.0, %v123
    %125 = vdwg.mxu0
    %v126 = vld [vmem:[#allocation2] sm:$0xff]
    %v127 = vld [vmem:[#allocation2 + $0x8] sm:$0xff]
    %v128 = vld [vmem:[#allocation2 + $0x10] sm:$0xff]
    %v129 = vld [vmem:[#allocation2 + $0x18] sm:$0xff]
    %v130 = vld [vmem:[#allocation2 + $0x20] sm:$0xff]
    %v131 = vld [vmem:[#allocation2 + $0x28] sm:$0xff]
    %v132 = vld [vmem:[#allocation2 + $0x30] sm:$0xff]
    %v133 = vld [vmem:[#allocation2 + $0x38] sm:$0xff]
    %v134 = vld [vmem:[%s4] sm:$0xff]
    %v135 = vld [vmem:[%s4 + $0x8] sm:$0xff]
    %v136 = vld [vmem:[%s4 + $0x10] sm:$0xff]
    %v137 = vld [vmem:[%s4 + $0x18] sm:$0xff]
    %v138 = vld [vmem:[%s4 + $0x20] sm:$0xff]
    %v139 = vld [vmem:[%s4 + $0x28] sm:$0xff]
    %v140 = vld [vmem:[%s4 + $0x30] sm:$0xff]
    %v141 = vld [vmem:[%s4 + $0x38] sm:$0xff]
    %vm142 = vcmask 523264
    %v144 = vsel %vm142, %v126, 0
    %v147 = vsel %vm142, %v127, 0
    %v150 = vsel %vm142, %v128, 0
    %v153 = vsel %vm142, %v129, 0
    %v156 = vsel %vm142, %v130, 0
    %v159 = vsel %vm142, %v131, 0
    %v162 = vsel %vm142, %v132, 0
    %v165 = vsel %vm142, %v133, 0
    %167 = vmatpush.msra.mxu0 0.0
    %168 = vmatpush.msra.mxu0 0.0
    %169 = vmatpush.msra.mxu0 0.0
    %170 = vmatpush.msra.mxu0 0.0
    %171 = vmatpush.msra.mxu0 0.0
    %172 = vmatpush.msra.mxu0 0.0
    %173 = vmatpush.msra.mxu0 0.0
    %174 = vmatpush.msra.mxu0 0.0
    %175 = vmatpush.msra.mxu0 %v141
    %176 = vmatpush.msra.mxu0 %v140
    %177 = vmatpush.msra.mxu0 %v139
    %178 = vmatpush.msra.mxu0 %v138
    %179 = vmatpush.msra.mxu0 %v137
    %180 = vmatpush.msra.mxu0 %v136
    %181 = vmatpush.msra.mxu0 %v135
    %182 = vmatpush.msra.mxu0 %v134
    %183 = vmatmul.f32.gmra.mxu0 %v144
    %v184 = vpop.f32.mrf.mxu0
    %v185 = vadd.f32 0.0, %v184
    %186 = vmatmul.f32.gmra.mxu0 %v147
    %v187 = vpop.f32.mrf.mxu0
    %v188 = vadd.f32 0.0, %v187
    %189 = vmatmul.f32.gmra.mxu0 %v150
    %v190 = vpop.f32.mrf.mxu0
    %v191 = vadd.f32 0.0, %v190
    %192 = vmatmul.f32.gmra.mxu0 %v153
    %v193 = vpop.f32.mrf.mxu0
    %v194 = vadd.f32 0.0, %v193
    %195 = vmatmul.f32.gmra.mxu0 %v156
    %v196 = vpop.f32.mrf.mxu0
    %v197 = vadd.f32 0.0, %v196
    %198 = vmatmul.f32.gmra.mxu0 %v159
    %v199 = vpop.f32.mrf.mxu0
    %v200 = vadd.f32 0.0, %v199
    %201 = vmatmul.f32.gmra.mxu0 %v162
    %v202 = vpop.f32.mrf.mxu0
    %v203 = vadd.f32 0.0, %v202
    %204 = vmatmul.f32.gmra.mxu0 %v165
    %v205 = vpop.f32.mrf.mxu0
    %v206 = vadd.f32 0.0, %v205
    %207 = vdwg.mxu0
    %v208 = vld [vmem:[%s4 + $0x40] sm:$0x1]
    %v209 = vld [vmem:[#allocation8 + $0x2] sm:$0x1]
    %v210 = vld [vmem:[#allocation8 + $0x3] sm:$0x1]
    %v211 = vtanh.pop %v185
    %v212 = vtanh.pop %v188
    %v213 = vperm.slane %v208, 0
    %v214 = vmul.f32 %v211, %v213
    %v215 = vmul.f32 %v212, %v213
    %218 = vrot.lane.b32.xlu0 %v214, 96
    %v219 = vpop.permute.xlu0 %218
    %220 = vrot.lane.b32.xlu0 %v215, 96
    %v221 = vpop.permute.xlu0 %220
    %v224 = vsel %vm96, %v219, 0.0
    %225 = vadd.xlane.f32.xlu0 %v224
    %v226 = vpop.xlane.xlu0 %225
    %v227 = vsel %vm96, %v221, 0.0
    %228 = vadd.xlane.f32.xlu0 %v227
    %v229 = vpop.xlane.xlu0 %228
    %v230 = vsub.f32 -inf, %v226
    %v231 = vsub.f32 -inf, %v229
    %v232 = vmul.f32 %v230, 1.442695
    %v233 = vpow.pop %v232
    %v234 = vmul.f32 %v231, 1.442695
    %v235 = vpow.pop %v234
    %v236 = vsub.f32 %v226, %v226
    %v237 = vsub.f32 %v229, %v229
    %v238 = vmul.f32 %v236, 1.442695
    %v239 = vpow.pop %v238
    %v240 = vmul.f32 %v237, 1.442695
    %v241 = vpow.pop %v240
    %v242 = vmul.f32 %v233, 0.0
    %v243 = vmul.f32 %v235, 0.0
    %v244 = vadd.f32 %v242, %v239
    %v245 = vadd.f32 %v243, %v241
    %v246 = vld [vmem:[#allocation2] sm:$0xff]
    %v247 = vld [vmem:[#allocation2 + $0x8] sm:$0xff]
    %v248 = vmul.f32 %v239, %v246
    %v249 = vmul.f32 %v241, %v247
    %v250 = vadd.f32 %v242, %v248
    %v251 = vadd.f32 %v243, %v249
    %v252 = vadd.f32 %v121, %v185
    %v253 = vadd.f32 %v124, %v188
    %v254 = vsel %vm96, %v252, 0.0
    %255 = vadd.xlane.f32.xlu0 %v254
    %v256 = vpop.xlane.xlu0 %255
    %v257 = vsel %vm96, %v253, 0.0
    %258 = vadd.xlane.f32.xlu0 %v257
    %v259 = vpop.xlane.xlu0 %258
    %v260 = vrcp.pop 32.0
    %v261 = vmul.f32 32.0, %v260
    %v262 = vsub.f32 1.0, %v261
    %v263 = vmul.f32 %v260, %v262
    %v264 = vadd.f32 %v260, %v263
    %vm265 = vweird.f32 %v260
    %v266 = vsel %vm265, %v260, %v264
    %v267 = vmul.f32 %v256, %v266
    %v268 = vmul.f32 %v259, %v266
    %v269 = vsub.f32 %v252, %v267
    %v270 = vsub.f32 %v253, %v268
    %v271 = vmul.f32 %v269, %v269
    %v272 = vmul.f32 %v270, %v270
    %v273 = vsel %vm96, %v271, 0.0
    %274 = vadd.xlane.f32.xlu0 %v273
    %v275 = vpop.xlane.xlu0 %274
    %v276 = vsel %vm96, %v272, 0.0
    %277 = vadd.xlane.f32.xlu0 %v276
    %v278 = vpop.xlane.xlu0 %277
    %v279 = vmul.f32 %v275, %v266
    %v280 = vmul.f32 %v278, %v266
    %v281 = vadd.f32 %v279, 1e-05
    %v282 = vadd.f32 %v280, 1e-05
    %v283 = vrsqrt.pop %v281
    %v284 = vmul.f32 %v283, %v281
    %v285 = vmul.f32 %v284, %v283
    %v286 = vmul.f32 0.5, %v285
    %v287 = vsub.f32 1.5, %v286
    %v288 = vmul.f32 %v283, %v287
    %vm289 = vweird.f32 %v281
    %vm290 = vweird.f32 %v283
    %vm291 = vmor %vm289, %vm290
    %v292 = vsel %vm291, %v283, %v288
    %v293 = vrsqrt.pop %v282
    %v294 = vmul.f32 %v293, %v282
    %v295 = vmul.f32 %v294, %v293
    %v296 = vmul.f32 0.5, %v295
    %v297 = vsub.f32 1.5, %v296
    %v298 = vmul.f32 %v293, %v297
    %vm299 = vweird.f32 %v282
    %vm300 = vweird.f32 %v293
    %vm301 = vmor %vm299, %vm300
    %v302 = vsel %vm301, %v293, %v298
    %v303 = vmul.f32 %v269, %v292
    %v304 = vmul.f32 %v270, %v302
    %v305 = vperm.slane %v209, 0
    %v306 = vmul.f32 %v303, %v305
    %v307 = vmul.f32 %v304, %v305
    %v308 = vperm.slane %v210, 0
    %v309 = vadd.f32 %v306, %v308
    %v310 = vadd.f32 %v307, %v308
    %v311 = vxor.u32 %v309, 2147483648
    %v312 = vxor.u32 %v310, 2147483648
    %v313 = vmul.f32 %v311, 1.442695
    %v314 = vpow.pop %v313
    %v315 = vmul.f32 %v312, 1.442695
    %v316 = vpow.pop %v315
    %v317 = vadd.f32 %v314, 1.0
    %v318 = vadd.f32 %v316, 1.0
    %v319 = vrcp.pop %v317
    %v320 = vmul.f32 %v317, %v319
    %v321 = vsub.f32 1.0, %v320
    %v322 = vmul.f32 %v319, %v321
    %v323 = vadd.f32 %v319, %v322
    %vm324 = vweird.f32 %v317
    %vm325 = vweird.f32 %v319
    %vm326 = vmor %vm324, %vm325
    %v327 = vsel %vm326, %v319, %v323
    %v328 = vand.u32 2147483647, %v317
    %vm329 = vcmp.eq.f32.partialorder %v328, 8.507059e+37
    %v330 = vand.u32 %v317, 2147483648
    %v331 = vor.u32 1.1754944e-38, %v330
    %v332 = vsel %vm329, %v331, %v327
    %v333 = vmul.f32 1.0, %v332
    %v334 = vrcp.pop %v318
    %v335 = vmul.f32 %v318, %v334
    %v336 = vsub.f32 1.0, %v335
    %v337 = vmul.f32 %v334, %v336
    %v338 = vadd.f32 %v334, %v337
    %vm339 = vweird.f32 %v318
    %vm340 = vweird.f32 %v334
    %vm341 = vmor %vm339, %vm340
    %v342 = vsel %vm341, %v334, %v338
    %v343 = vand.u32 2147483647, %v318
    %vm344 = vcmp.eq.f32.partialorder %v343, 8.507059e+37
    %v345 = vand.u32 %v318, 2147483648
    %v346 = vor.u32 1.1754944e-38, %v345
    %v347 = vsel %vm344, %v346, %v342
    %v348 = vmul.f32 1.0, %v347
    %v349 = vld [vmem:[%s2] sm:$0xff]
    %v350 = vld [vmem:[%s2 + $0x8] sm:$0xff]
    %v351 = vmul.f32 %v333, %v349
    %v352 = vmul.f32 %v348, %v350
    %v353 = vadd.f32 %v351, 0.0
    %v354 = vadd.f32 %v352, 0.0
    %v355 = vtanh.pop %v191
    %v356 = vtanh.pop %v194
    %v357 = vmul.f32 %v355, %v213
    %v358 = vmul.f32 %v356, %v213
    %361 = vrot.lane.b32.xlu0 %v357, 96
    %v362 = vpop.permute.xlu0 %361
    %363 = vrot.lane.b32.xlu0 %v358, 96
    %v364 = vpop.permute.xlu0 %363
    %v367 = vsel %vm96, %v362, 0.0
    %368 = vadd.xlane.f32.xlu0 %v367
    %v369 = vpop.xlane.xlu0 %368
    %v370 = vsel %vm96, %v364, 0.0
    %371 = vadd.xlane.f32.xlu0 %v370
    %v372 = vpop.xlane.xlu0 %371
    %v373 = vmax.f32 %v226, %v369
    %v374 = vmax.f32 %v229, %v372
    %v375 = vsub.f32 %v226, %v373
    %v376 = vsub.f32 %v229, %v374
    %v377 = vmul.f32 %v375, 1.442695
    %v378 = vpow.pop %v377
    %v379 = vmul.f32 %v376, 1.442695
    %v380 = vpow.pop %v379
    %v381 = vsub.f32 %v369, %v373
    %v382 = vsub.f32 %v372, %v374
    %v383 = vmul.f32 %v381, 1.442695
    %v384 = vpow.pop %v383
    %v385 = vmul.f32 %v382, 1.442695
    %v386 = vpow.pop %v385
    %v387 = vmul.f32 %v244, %v378
    %v388 = vmul.f32 %v245, %v380
    %v389 = vadd.f32 %v387, %v384
    %v390 = vadd.f32 %v388, %v386
    %v391 = vld [vmem:[#allocation2 + $0x10] sm:$0xff]
    %v392 = vld [vmem:[#allocation2 + $0x18] sm:$0xff]
    %v393 = vmul.f32 %v250, %v378
    %v394 = vmul.f32 %v251, %v380
    %v395 = vmul.f32 %v384, %v391
    %v396 = vmul.f32 %v386, %v392
    %v397 = vadd.f32 %v393, %v395
    %v398 = vadd.f32 %v394, %v396
    %v399 = vadd.f32 %v121, %v191
    %v400 = vadd.f32 %v124, %v194
    %v401 = vsel %vm96, %v399, 0.0
    %402 = vadd.xlane.f32.xlu0 %v401
    %v403 = vpop.xlane.xlu0 %402
    %v404 = vsel %vm96, %v400, 0.0
    %405 = vadd.xlane.f32.xlu0 %v404
    %v406 = vpop.xlane.xlu0 %405
    %v407 = vmul.f32 %v403, %v266
    %v408 = vmul.f32 %v406, %v266
    %v409 = vsub.f32 %v399, %v407
    %v410 = vsub.f32 %v400, %v408
    %v411 = vmul.f32 %v409, %v409
    %v412 = vmul.f32 %v410, %v410
    %v413 = vsel %vm96, %v411, 0.0
    %414 = vadd.xlane.f32.xlu0 %v413
    %v415 = vpop.xlane.xlu0 %414
    %v416 = vsel %vm96, %v412, 0.0
    %417 = vadd.xlane.f32.xlu0 %v416
    %v418 = vpop.xlane.xlu0 %417
    %v419 = vmul.f32 %v415, %v266
    %v420 = vmul.f32 %v418, %v266
    %v421 = vadd.f32 %v419, 1e-05
    %v422 = vadd.f32 %v420, 1e-05
    %v423 = vrsqrt.pop %v421
    %v424 = vmul.f32 %v423, %v421
    %v425 = vmul.f32 %v424, %v423
    %v426 = vmul.f32 0.5, %v425
    %v427 = vsub.f32 1.5, %v426
    %v428 = vmul.f32 %v423, %v427
    %vm429 = vweird.f32 %v421
    %vm430 = vweird.f32 %v423
    %vm431 = vmor %vm429, %vm430
    %v432 = vsel %vm431, %v423, %v428
    %v433 = vrsqrt.pop %v422
    %v434 = vmul.f32 %v433, %v422
    %v435 = vmul.f32 %v434, %v433
    %v436 = vmul.f32 0.5, %v435
    %v437 = vsub.f32 1.5, %v436
    %v438 = vmul.f32 %v433, %v437
    %vm439 = vweird.f32 %v422
    %vm440 = vweird.f32 %v433
    %vm441 = vmor %vm439, %vm440
    %v442 = vsel %vm441, %v433, %v438
    %v443 = vmul.f32 %v409, %v432
    %v444 = vmul.f32 %v410, %v442
    %v445 = vmul.f32 %v443, %v305
    %v446 = vmul.f32 %v444, %v305
    %v447 = vadd.f32 %v445, %v308
    %v448 = vadd.f32 %v446, %v308
    %v449 = vxor.u32 %v447, 2147483648
    %v450 = vxor.u32 %v448, 2147483648
    %v451 = vmul.f32 %v449, 1.442695
    %v452 = vpow.pop %v451
    %v453 = vmul.f32 %v450, 1.442695
    %v454 = vpow.pop %v453
    %v455 = vadd.f32 %v452, 1.0
    %v456 = vadd.f32 %v454, 1.0
    %v457 = vrcp.pop %v455
    %v458 = vmul.f32 %v455, %v457
    %v459 = vsub.f32 1.0, %v458
    %v460 = vmul.f32 %v457, %v459
    %v461 = vadd.f32 %v457, %v460
    %vm462 = vweird.f32 %v455
    %vm463 = vweird.f32 %v457
    %vm464 = vmor %vm462, %vm463
    %v465 = vsel %vm464, %v457, %v461
    %v466 = vand.u32 2147483647, %v455
    %vm467 = vcmp.eq.f32.partialorder %v466, 8.507059e+37
    %v468 = vand.u32 %v455, 2147483648
    %v469 = vor.u32 1.1754944e-38, %v468
    %v470 = vsel %vm467, %v469, %v465
    %v471 = vmul.f32 1.0, %v470
    %v472 = vrcp.pop %v456
    %v473 = vmul.f32 %v456, %v472
    %v474 = vsub.f32 1.0, %v473
    %v475 = vmul.f32 %v472, %v474
    %v476 = vadd.f32 %v472, %v475
    %vm477 = vweird.f32 %v456
    %vm478 = vweird.f32 %v472
    %vm479 = vmor %vm477, %vm478
    %v480 = vsel %vm479, %v472, %v476
    %v481 = vand.u32 2147483647, %v456
    %vm482 = vcmp.eq.f32.partialorder %v481, 8.507059e+37
    %v483 = vand.u32 %v456, 2147483648
    %v484 = vor.u32 1.1754944e-38, %v483
    %v485 = vsel %vm482, %v484, %v480
    %v486 = vmul.f32 1.0, %v485
    %v487 = vld [vmem:[%s2 + $0x10] sm:$0xff]
    %v488 = vld [vmem:[%s2 + $0x18] sm:$0xff]
    %v489 = vmul.f32 %v471, %v487
    %v490 = vmul.f32 %v486, %v488
    %v491 = vadd.f32 %v353, %v489
    %v492 = vadd.f32 %v354, %v490
    %v493 = vtanh.pop %v197
    %v494 = vtanh.pop %v200
    %v495 = vmul.f32 %v493, %v213
    %v496 = vmul.f32 %v494, %v213
    %499 = vrot.lane.b32.xlu0 %v495, 96
    %v500 = vpop.permute.xlu0 %499
    %501 = vrot.lane.b32.xlu0 %v496, 96
    %v502 = vpop.permute.xlu0 %501
    %v505 = vsel %vm96, %v500, 0.0
    %506 = vadd.xlane.f32.xlu0 %v505
    %v507 = vpop.xlane.xlu0 %506
    %v508 = vsel %vm96, %v502, 0.0
    %509 = vadd.xlane.f32.xlu0 %v508
    %v510 = vpop.xlane.xlu0 %509
    %v511 = vmax.f32 %v373, %v507
    %v512 = vmax.f32 %v374, %v510
    %v513 = vsub.f32 %v373, %v511
    %v514 = vsub.f32 %v374, %v512
    %v515 = vmul.f32 %v513, 1.442695
    %v516 = vpow.pop %v515
    %v517 = vmul.f32 %v514, 1.442695
    %v518 = vpow.pop %v517
    %v519 = vsub.f32 %v507, %v511
    %v520 = vsub.f32 %v510, %v512
    %v521 = vmul.f32 %v519, 1.442695
    %v522 = vpow.pop %v521
    %v523 = vmul.f32 %v520, 1.442695
    %v524 = vpow.pop %v523
    %v525 = vmul.f32 %v389, %v516
    %v526 = vmul.f32 %v390, %v518
    %v527 = vadd.f32 %v525, %v522
    %v528 = vadd.f32 %v526, %v524
    %v529 = vld [vmem:[#allocation2 + $0x20] sm:$0xff]
    %v530 = vld [vmem:[#allocation2 + $0x28] sm:$0xff]
    %v531 = vmul.f32 %v397, %v516
    %v532 = vmul.f32 %v398, %v518
    %v533 = vmul.f32 %v522, %v529
    %v534 = vmul.f32 %v524, %v530
    %v535 = vadd.f32 %v531, %v533
    %v536 = vadd.f32 %v532, %v534
    %v537 = vadd.f32 %v121, %v197
    %v538 = vadd.f32 %v124, %v200
    %v539 = vsel %vm96, %v537, 0.0
    %540 = vadd.xlane.f32.xlu0 %v539
    %v541 = vpop.xlane.xlu0 %540
    %v542 = vsel %vm96, %v538, 0.0
    %543 = vadd.xlane.f32.xlu0 %v542
    %v544 = vpop.xlane.xlu0 %543
    %v545 = vmul.f32 %v541, %v266
    %v546 = vmul.f32 %v544, %v266
    %v547 = vsub.f32 %v537, %v545
    %v548 = vsub.f32 %v538, %v546
    %v549 = vmul.f32 %v547, %v547
    %v550 = vmul.f32 %v548, %v548
    %v551 = vsel %vm96, %v549, 0.0
    %552 = vadd.xlane.f32.xlu0 %v551
    %v553 = vpop.xlane.xlu0 %552
    %v554 = vsel %vm96, %v550, 0.0
    %555 = vadd.xlane.f32.xlu0 %v554
    %v556 = vpop.xlane.xlu0 %555
    %v557 = vmul.f32 %v553, %v266
    %v558 = vmul.f32 %v556, %v266
    %v559 = vadd.f32 %v557, 1e-05
    %v560 = vadd.f32 %v558, 1e-05
    %v561 = vrsqrt.pop %v559
    %v562 = vmul.f32 %v561, %v559
    %v563 = vmul.f32 %v562, %v561
    %v564 = vmul.f32 0.5, %v563
    %v565 = vsub.f32 1.5, %v564
    %v566 = vmul.f32 %v561, %v565
    %vm567 = vweird.f32 %v559
    %vm568 = vweird.f32 %v561
    %vm569 = vmor %vm567, %vm568
    %v570 = vsel %vm569, %v561, %v566
    %v571 = vrsqrt.pop %v560
    %v572 = vmul.f32 %v571, %v560
    %v573 = vmul.f32 %v572, %v571
    %v574 = vmul.f32 0.5, %v573
    %v575 = vsub.f32 1.5, %v574
    %v576 = vmul.f32 %v571, %v575
    %vm577 = vweird.f32 %v560
    %vm578 = vweird.f32 %v571
    %vm579 = vmor %vm577, %vm578
    %v580 = vsel %vm579, %v571, %v576
    %v581 = vmul.f32 %v547, %v570
    %v582 = vmul.f32 %v548, %v580
    %v583 = vmul.f32 %v581, %v305
    %v584 = vmul.f32 %v582, %v305
    %v585 = vadd.f32 %v583, %v308
    %v586 = vadd.f32 %v584, %v308
    %v587 = vxor.u32 %v585, 2147483648
    %v588 = vxor.u32 %v586, 2147483648
    %v589 = vmul.f32 %v587, 1.442695
    %v590 = vpow.pop %v589
    %v591 = vmul.f32 %v588, 1.442695
    %v592 = vpow.pop %v591
    %v593 = vadd.f32 %v590, 1.0
    %v594 = vadd.f32 %v592, 1.0
    %v595 = vrcp.pop %v593
    %v596 = vmul.f32 %v593, %v595
    %v597 = vsub.f32 1.0, %v596
    %v598 = vmul.f32 %v595, %v597
    %v599 = vadd.f32 %v595, %v598
    %vm600 = vweird.f32 %v593
    %vm601 = vweird.f32 %v595
    %vm602 = vmor %vm600, %vm601
    %v603 = vsel %vm602, %v595, %v599
    %v604 = vand.u32 2147483647, %v593
    %vm605 = vcmp.eq.f32.partialorder %v604, 8.507059e+37
    %v606 = vand.u32 %v593, 2147483648
    %v607 = vor.u32 1.1754944e-38, %v606
    %v608 = vsel %vm605, %v607, %v603
    %v609 = vmul.f32 1.0, %v608
    %v610 = vrcp.pop %v594
    %v611 = vmul.f32 %v594, %v610
    %v612 = vsub.f32 1.0, %v611
    %v613 = vmul.f32 %v610, %v612
    %v614 = vadd.f32 %v610, %v613
    %vm615 = vweird.f32 %v594
    %vm616 = vweird.f32 %v610
    %vm617 = vmor %vm615, %vm616
    %v618 = vsel %vm617, %v610, %v614
    %v619 = vand.u32 2147483647, %v594
    %vm620 = vcmp.eq.f32.partialorder %v619, 8.507059e+37
    %v621 = vand.u32 %v594, 2147483648
    %v622 = vor.u32 1.1754944e-38, %v621
    %v623 = vsel %vm620, %v622, %v618
    %v624 = vmul.f32 1.0, %v623
    %v625 = vld [vmem:[%s2 + $0x20] sm:$0xff]
    %v626 = vld [vmem:[%s2 + $0x28] sm:$0xff]
    %v627 = vmul.f32 %v609, %v625
    %v628 = vmul.f32 %v624, %v626
    %v629 = vadd.f32 %v491, %v627
    %v630 = vadd.f32 %v492, %v628
    %v631 = vtanh.pop %v203
    %v632 = vtanh.pop %v206
    %v633 = vmul.f32 %v631, %v213
    %v634 = vmul.f32 %v632, %v213
    %637 = vrot.lane.b32.xlu0 %v633, 96
    %v638 = vpop.permute.xlu0 %637
    %639 = vrot.lane.b32.xlu0 %v634, 96
    %v640 = vpop.permute.xlu0 %639
    %v643 = vsel %vm96, %v638, 0.0
    %644 = vadd.xlane.f32.xlu0 %v643
    %v645 = vpop.xlane.xlu0 %644
    %v646 = vsel %vm96, %v640, 0.0
    %647 = vadd.xlane.f32.xlu0 %v646
    %v648 = vpop.xlane.xlu0 %647
    %v649 = vmax.f32 %v511, %v645
    %v650 = vmax.f32 %v512, %v648
    %v651 = vsub.f32 %v511, %v649
    %v652 = vsub.f32 %v512, %v650
    %v653 = vmul.f32 %v651, 1.442695
    %v654 = vpow.pop %v653
    %v655 = vmul.f32 %v652, 1.442695
    %v656 = vpow.pop %v655
    %v657 = vsub.f32 %v645, %v649
    %v658 = vsub.f32 %v648, %v650
    %v659 = vmul.f32 %v657, 1.442695
    %v660 = vpow.pop %v659
    %v661 = vmul.f32 %v658, 1.442695
    %v662 = vpow.pop %v661
    %v663 = vmul.f32 %v527, %v654
    %v664 = vmul.f32 %v528, %v656
    %v665 = vadd.f32 %v663, %v660
    %v666 = vadd.f32 %v664, %v662
    %v667 = vmul.f32 %v535, %v654
    %v668 = vmul.f32 %v536, %v656
    %v669 = vmul.f32 %v660, %v132
    %v670 = vmul.f32 %v662, %v133
    %v671 = vadd.f32 %v667, %v669
    %v672 = vadd.f32 %v668, %v670
    %v673 = vadd.f32 %v121, %v203
    %v674 = vadd.f32 %v124, %v206
    %v675 = vsel %vm96, %v673, 0.0
    %676 = vadd.xlane.f32.xlu0 %v675
    %v677 = vpop.xlane.xlu0 %676
    %v678 = vsel %vm96, %v674, 0.0
    %679 = vadd.xlane.f32.xlu0 %v678
    %v680 = vpop.xlane.xlu0 %679
    %v681 = vmul.f32 %v677, %v266
    %v682 = vmul.f32 %v680, %v266
    %v683 = vsub.f32 %v673, %v681
    %v684 = vsub.f32 %v674, %v682
    %v685 = vmul.f32 %v683, %v683
    %v686 = vmul.f32 %v684, %v684
    %v687 = vsel %vm96, %v685, 0.0
    %688 = vadd.xlane.f32.xlu0 %v687
    %v689 = vpop.xlane.xlu0 %688
    %v690 = vsel %vm96, %v686, 0.0
    %691 = vadd.xlane.f32.xlu0 %v690
    %v692 = vpop.xlane.xlu0 %691
    %v693 = vmul.f32 %v689, %v266
    %v694 = vmul.f32 %v692, %v266
    %v695 = vadd.f32 %v693, 1e-05
    %v696 = vadd.f32 %v694, 1e-05
    %v697 = vrsqrt.pop %v695
    %v698 = vmul.f32 %v697, %v695
    %v699 = vmul.f32 %v698, %v697
    %v700 = vmul.f32 0.5, %v699
    %v701 = vsub.f32 1.5, %v700
    %v702 = vmul.f32 %v697, %v701
    %vm703 = vweird.f32 %v695
    %vm704 = vweird.f32 %v697
    %vm705 = vmor %vm703, %vm704
    %v706 = vsel %vm705, %v697, %v702
    %v707 = vrsqrt.pop %v696
    %v708 = vmul.f32 %v707, %v696
    %v709 = vmul.f32 %v708, %v707
    %v710 = vmul.f32 0.5, %v709
    %v711 = vsub.f32 1.5, %v710
    %v712 = vmul.f32 %v707, %v711
    %vm713 = vweird.f32 %v696
    %vm714 = vweird.f32 %v707
    %vm715 = vmor %vm713, %vm714
    %v716 = vsel %vm715, %v707, %v712
    %v717 = vmul.f32 %v683, %v706
    %v718 = vmul.f32 %v684, %v716
    %v719 = vmul.f32 %v717, %v305
    %v720 = vmul.f32 %v718, %v305
    %v721 = vadd.f32 %v719, %v308
    %v722 = vadd.f32 %v720, %v308
    %v723 = vxor.u32 %v721, 2147483648
    %v724 = vxor.u32 %v722, 2147483648
    %v725 = vmul.f32 %v723, 1.442695
    %v726 = vpow.pop %v725
    %v727 = vmul.f32 %v724, 1.442695
    %v728 = vpow.pop %v727
    %v729 = vadd.f32 %v726, 1.0
    %v730 = vadd.f32 %v728, 1.0
    %v731 = vrcp.pop %v729
    %v732 = vmul.f32 %v729, %v731
    %v733 = vsub.f32 1.0, %v732
    %v734 = vmul.f32 %v731, %v733
    %v735 = vadd.f32 %v731, %v734
    %vm736 = vweird.f32 %v729
    %vm737 = vweird.f32 %v731
    %vm738 = vmor %vm736, %vm737
    %v739 = vsel %vm738, %v731, %v735
    %v740 = vand.u32 2147483647, %v729
    %vm741 = vcmp.eq.f32.partialorder %v740, 8.507059e+37
    %v742 = vand.u32 %v729, 2147483648
    %v743 = vor.u32 1.1754944e-38, %v742
    %v744 = vsel %vm741, %v743, %v739
    %v745 = vmul.f32 1.0, %v744
    %v746 = vrcp.pop %v730
    %v747 = vmul.f32 %v730, %v746
    %v748 = vsub.f32 1.0, %v747
    %v749 = vmul.f32 %v746, %v748
    %v750 = vadd.f32 %v746, %v749
    %vm751 = vweird.f32 %v730
    %vm752 = vweird.f32 %v746
    %vm753 = vmor %vm751, %vm752
    %v754 = vsel %vm753, %v746, %v750
    %v755 = vand.u32 2147483647, %v730
    %vm756 = vcmp.eq.f32.partialorder %v755, 8.507059e+37
    %v757 = vand.u32 %v730, 2147483648
    %v758 = vor.u32 1.1754944e-38, %v757
    %v759 = vsel %vm756, %v758, %v754
    %v760 = vmul.f32 1.0, %v759
    %v761 = vld [vmem:[%s2 + $0x30] sm:$0xff]
    %v762 = vld [vmem:[%s2 + $0x38] sm:$0xff]
    %v763 = vmul.f32 %v745, %v761
    %v764 = vmul.f32 %v760, %v762
    %v765 = vadd.f32 %v629, %v763
    %v766 = vadd.f32 %v630, %v764
    %v767 = vrcp.pop %v665
    %v768 = vrcp.pop %v666
    %v769 = vmul.f32 %v671, %v767
    %v770 = vmul.f32 %v672, %v768
    %v771 = vld [vmem:[#allocation7] sm:$0xff]
    %v772 = vld [vmem:[#allocation7 + $0x8] sm:$0xff]
    %v773 = vld [vmem:[#allocation7 + $0x10] sm:$0xff]
    %v774 = vld [vmem:[#allocation7 + $0x18] sm:$0xff]
    %v776 = vsel %vm96, %v769, 0
    %v779 = vsel %vm96, %v770, 0
    %781 = vmatpush.msra.mxu0 0.0
    %782 = vmatpush.msra.mxu0 0.0
    %783 = vmatpush.msra.mxu0 0.0
    %784 = vmatpush.msra.mxu0 0.0
    %785 = vmatpush.msra.mxu0 0.0
    %786 = vmatpush.msra.mxu0 0.0
    %787 = vmatpush.msra.mxu0 0.0
    %788 = vmatpush.msra.mxu0 0.0
    %789 = vmatpush.msra.mxu0 0.0
    %790 = vmatpush.msra.mxu0 0.0
    %791 = vmatpush.msra.mxu0 0.0
    %792 = vmatpush.msra.mxu0 0.0
    %793 = vmatpush.msra.mxu0 %v774
    %794 = vmatpush.msra.mxu0 %v773
    %795 = vmatpush.msra.mxu0 %v772
    %796 = vmatpush.msra.mxu0 %v771
    %797 = vmatmul.f32.gmra.mxu0 %v776
    %v798 = vpop.f32.mrf.mxu0
    %v799 = vadd.f32 0.0, %v798
    %800 = vmatmul.f32.gmra.mxu0 %v779
    %v801 = vpop.f32.mrf.mxu0
    %v802 = vadd.f32 0.0, %v801
    %803 = vdwg.mxu0
    %v804 = vld [vmem:[#allocation8] sm:$0x1]
    %v805 = vld [vmem:[#allocation8 + $0x1] sm:$0x1]
    %v806 = vsel %vm96, %v799, 0.0
    %807 = vadd.xlane.f32.xlu0 %v806
    %v808 = vpop.xlane.xlu0 %807
    %v809 = vsel %vm96, %v802, 0.0
    %810 = vadd.xlane.f32.xlu0 %v809
    %v811 = vpop.xlane.xlu0 %810
    %v812 = vmul.f32 %v808, %v266
    %v813 = vmul.f32 %v811, %v266
    %v814 = vsub.f32 %v799, %v812
    %v815 = vsub.f32 %v802, %v813
    %v816 = vmul.f32 %v814, %v814
    %v817 = vmul.f32 %v815, %v815
    %v818 = vsel %vm96, %v816, 0.0
    %819 = vadd.xlane.f32.xlu0 %v818
    %v820 = vpop.xlane.xlu0 %819
    %v821 = vsel %vm96, %v817, 0.0
    %822 = vadd.xlane.f32.xlu0 %v821
    %v823 = vpop.xlane.xlu0 %822
    %v824 = vmul.f32 %v820, %v266
    %v825 = vmul.f32 %v823, %v266
    %v826 = vadd.f32 %v824, 1e-05
    %v827 = vadd.f32 %v825, 1e-05
    %v828 = vrsqrt.pop %v826
    %v829 = vmul.f32 %v828, %v826
    %v830 = vmul.f32 %v829, %v828
    %v831 = vmul.f32 0.5, %v830
    %v832 = vsub.f32 1.5, %v831
    %v833 = vmul.f32 %v828, %v832
    %vm834 = vweird.f32 %v826
    %vm835 = vweird.f32 %v828
    %vm836 = vmor %vm834, %vm835
    %v837 = vsel %vm836, %v828, %v833
    %v838 = vrsqrt.pop %v827
    %v839 = vmul.f32 %v838, %v827
    %v840 = vmul.f32 %v839, %v838
    %v841 = vmul.f32 0.5, %v840
    %v842 = vsub.f32 1.5, %v841
    %v843 = vmul.f32 %v838, %v842
    %vm844 = vweird.f32 %v827
    %vm845 = vweird.f32 %v838
    %vm846 = vmor %vm844, %vm845
    %v847 = vsel %vm846, %v838, %v843
    %v848 = vmul.f32 %v814, %v837
    %v849 = vmul.f32 %v815, %v847
    %v850 = vperm.slane %v804, 0
    %v851 = vmul.f32 %v848, %v850
    %v852 = vmul.f32 %v849, %v850
    %v853 = vperm.slane %v805, 0
    %v854 = vadd.f32 %v851, %v853
    %v855 = vadd.f32 %v852, %v853
    %v856 = vtanh.pop %v854
    %v857 = vtanh.pop %v855
    %862 = vrot.lane.b32.xlu0 %v771, 96
    %v863 = vpop.permute.xlu0 %862
    %864 = vrot.lane.b32.xlu0 %v772, 96
    %v865 = vpop.permute.xlu0 %864
    %866 = vrot.lane.b32.xlu0 %v773, 96
    %v867 = vpop.permute.xlu0 %866
    %868 = vrot.lane.b32.xlu0 %v774, 96
    %v869 = vpop.permute.xlu0 %868
    %v875 = vsel %vm96, %v856, 0
    %v878 = vsel %vm96, %v857, 0
    %880 = vmatpush.msra.mxu0 0.0
    %881 = vmatpush.msra.mxu0 0.0
    %882 = vmatpush.msra.mxu0 0.0
    %883 = vmatpush.msra.mxu0 0.0
    %884 = vmatpush.msra.mxu0 0.0
    %885 = vmatpush.msra.mxu0 0.0
    %886 = vmatpush.msra.mxu0 0.0
    %887 = vmatpush.msra.mxu0 0.0
    %888 = vmatpush.msra.mxu0 0.0
    %889 = vmatpush.msra.mxu0 0.0
    %890 = vmatpush.msra.mxu0 0.0
    %891 = vmatpush.msra.mxu0 0.0
    %892 = vmatpush.msra.mxu0 %v869
    %893 = vmatpush.msra.mxu0 %v867
    %894 = vmatpush.msra.mxu0 %v865
    %895 = vmatpush.msra.mxu0 %v863
    %896 = vmatmul.f32.gmra.mxu0 %v875
    %v897 = vpop.f32.mrf.mxu0
    %v898 = vadd.f32 0.0, %v897
    %899 = vmatmul.f32.gmra.mxu0 %v878
    %v900 = vpop.f32.mrf.mxu0
    %v901 = vadd.f32 0.0, %v900
    %902 = vdwg.mxu0
    %905 = vrot.lane.b32.xlu0 %v898, 32
    %v906 = vpop.permute.xlu0 %905
    %907 = vrot.lane.b32.xlu0 %v901, 32
    %v908 = vpop.permute.xlu0 %907
    %v911 = vadd.f32 %v121, %v906
    %v912 = vadd.f32 %v124, %v908
    %v913 = vld [vmem:[#allocation8 + $0x4] sm:$0x1]
    %v914 = vld [vmem:[#allocation8 + $0x5] sm:$0x1]
    %917 = vrot.lane.b32.xlu0 %v911, 96
    %v918 = vpop.permute.xlu0 %917
    %919 = vrot.lane.b32.xlu0 %v912, 96
    %v920 = vpop.permute.xlu0 %919
    %v923 = vsel %vm96, %v918, 0.0
    %924 = vadd.xlane.f32.xlu0 %v923
    %v925 = vpop.xlane.xlu0 %924
    %v926 = vsel %vm96, %v920, 0.0
    %927 = vadd.xlane.f32.xlu0 %v926
    %v928 = vpop.xlane.xlu0 %927
    %v929 = vmul.f32 %v925, %v266
    %v930 = vmul.f32 %v928, %v266
    %v931 = vsub.f32 %v911, %v929
    %v932 = vsub.f32 %v912, %v930
    %v933 = vmul.f32 %v931, %v931
    %v934 = vmul.f32 %v932, %v932
    %937 = vrot.lane.b32.xlu0 %v933, 96
    %v938 = vpop.permute.xlu0 %937
    %939 = vrot.lane.b32.xlu0 %v934, 96
    %v940 = vpop.permute.xlu0 %939
    %v943 = vsel %vm96, %v938, 0.0
    %944 = vadd.xlane.f32.xlu0 %v943
    %v945 = vpop.xlane.xlu0 %944
    %v946 = vsel %vm96, %v940, 0.0
    %947 = vadd.xlane.f32.xlu0 %v946
    %v948 = vpop.xlane.xlu0 %947
    %v949 = vmul.f32 %v945, %v266
    %v950 = vmul.f32 %v948, %v266
    %v951 = vadd.f32 %v949, 1e-05
    %v952 = vadd.f32 %v950, 1e-05
    %v953 = vrsqrt.pop %v951
    %v954 = vmul.f32 %v953, %v951
    %v955 = vmul.f32 %v954, %v953
    %v956 = vmul.f32 0.5, %v955
    %v957 = vsub.f32 1.5, %v956
    %v958 = vmul.f32 %v953, %v957
    %vm959 = vweird.f32 %v951
    %vm960 = vweird.f32 %v953
    %vm961 = vmor %vm959, %vm960
    %v962 = vsel %vm961, %v953, %v958
    %v963 = vrsqrt.pop %v952
    %v964 = vmul.f32 %v963, %v952
    %v965 = vmul.f32 %v964, %v963
    %v966 = vmul.f32 0.5, %v965
    %v967 = vsub.f32 1.5, %v966
    %v968 = vmul.f32 %v963, %v967
    %vm969 = vweird.f32 %v952
    %vm970 = vweird.f32 %v963
    %vm971 = vmor %vm969, %vm970
    %v972 = vsel %vm971, %v963, %v968
    %v973 = vmul.f32 %v931, %v962
    %v974 = vmul.f32 %v932, %v972
    %v975 = vperm.slane %v913, 0
    %977 = vrot.lane.b32.xlu0 %v975, 32
    %v978 = vpop.permute.xlu0 %977
    %v980 = vmul.f32 %v973, %v978
    %v981 = vmul.f32 %v974, %v978
    %v982 = vperm.slane %v914, 0
    %984 = vrot.lane.b32.xlu0 %v982, 32
    %v985 = vpop.permute.xlu0 %984
    %v987 = vadd.f32 %v980, %v985
    %v988 = vadd.f32 %v981, %v985
    %v989 = vxor.u32 %v987, 2147483648
    %v990 = vxor.u32 %v988, 2147483648
    %v991 = vmul.f32 %v989, 1.442695
    %v992 = vpow.pop %v991
    %v993 = vmul.f32 %v990, 1.442695
    %v994 = vpow.pop %v993
    %v995 = vadd.f32 %v992, 1.0
    %v996 = vadd.f32 %v994, 1.0
    %v997 = vrcp.pop %v995
    %v998 = vmul.f32 %v995, %v997
    %v999 = vsub.f32 1.0, %v998
    %v1000 = vmul.f32 %v997, %v999
    %v1001 = vadd.f32 %v997, %v1000
    %vm1002 = vweird.f32 %v995
    %vm1003 = vweird.f32 %v997
    %vm1004 = vmor %vm1002, %vm1003
    %v1005 = vsel %vm1004, %v997, %v1001
    %v1006 = vand.u32 2147483647, %v995
    %vm1007 = vcmp.eq.f32.partialorder %v1006, 8.507059e+37
    %v1008 = vand.u32 %v995, 2147483648
    %v1009 = vor.u32 1.1754944e-38, %v1008
    %v1010 = vsel %vm1007, %v1009, %v1005
    %v1011 = vmul.f32 1.0, %v1010
    %v1012 = vrcp.pop %v996
    %v1013 = vmul.f32 %v996, %v1012
    %v1014 = vsub.f32 1.0, %v1013
    %v1015 = vmul.f32 %v1012, %v1014
    %v1016 = vadd.f32 %v1012, %v1015
    %vm1017 = vweird.f32 %v996
    %vm1018 = vweird.f32 %v1012
    %vm1019 = vmor %vm1017, %vm1018
    %v1020 = vsel %vm1019, %v1012, %v1016
    %v1021 = vand.u32 2147483647, %v996
    %vm1022 = vcmp.eq.f32.partialorder %v1021, 8.507059e+37
    %v1023 = vand.u32 %v996, 2147483648
    %v1024 = vor.u32 1.1754944e-38, %v1023
    %v1025 = vsel %vm1022, %v1024, %v1020
    %v1026 = vmul.f32 1.0, %v1025
    %v1027 = vld [vmem:[#allocation8 + $0x6] sm:$0x1]
    %v1028 = vld [vmem:[#allocation8 + $0x7] sm:$0x1]
    %1029 = vrot.lane.b32.xlu0 %v911, 64
    %v1030 = vpop.permute.xlu0 %1029
    %1031 = vrot.lane.b32.xlu0 %v912, 64
    %v1032 = vpop.permute.xlu0 %1031
    %v1035 = vsel %vm96, %v1030, 0.0
    %1036 = vadd.xlane.f32.xlu0 %v1035
    %v1037 = vpop.xlane.xlu0 %1036
    %v1038 = vsel %vm96, %v1032, 0.0
    %1039 = vadd.xlane.f32.xlu0 %v1038
    %v1040 = vpop.xlane.xlu0 %1039
    %v1041 = vmul.f32 %v1037, %v266
    %v1042 = vmul.f32 %v1040, %v266
    %v1043 = vsub.f32 %v911, %v1041
    %v1044 = vsub.f32 %v912, %v1042
    %v1045 = vmul.f32 %v1043, %v1043
    %v1046 = vmul.f32 %v1044, %v1044
    %1049 = vrot.lane.b32.xlu0 %v1045, 64
    %v1050 = vpop.permute.xlu0 %1049
    %1051 = vrot.lane.b32.xlu0 %v1046, 64
    %v1052 = vpop.permute.xlu0 %1051
    %v1055 = vsel %vm96, %v1050, 0.0
    %1056 = vadd.xlane.f32.xlu0 %v1055
    %v1057 = vpop.xlane.xlu0 %1056
    %v1058 = vsel %vm96, %v1052, 0.0
    %1059 = vadd.xlane.f32.xlu0 %v1058
    %v1060 = vpop.xlane.xlu0 %1059
    %v1061 = vmul.f32 %v1057, %v266
    %v1062 = vmul.f32 %v1060, %v266
    %v1063 = vadd.f32 %v1061, 1e-05
    %v1064 = vadd.f32 %v1062, 1e-05
    %v1065 = vrsqrt.pop %v1063
    %v1066 = vmul.f32 %v1065, %v1063
    %v1067 = vmul.f32 %v1066, %v1065
    %v1068 = vmul.f32 0.5, %v1067
    %v1069 = vsub.f32 1.5, %v1068
    %v1070 = vmul.f32 %v1065, %v1069
    %vm1071 = vweird.f32 %v1063
    %vm1072 = vweird.f32 %v1065
    %vm1073 = vmor %vm1071, %vm1072
    %v1074 = vsel %vm1073, %v1065, %v1070
    %v1075 = vrsqrt.pop %v1064
    %v1076 = vmul.f32 %v1075, %v1064
    %v1077 = vmul.f32 %v1076, %v1075
    %v1078 = vmul.f32 0.5, %v1077
    %v1079 = vsub.f32 1.5, %v1078
    %v1080 = vmul.f32 %v1075, %v1079
    %vm1081 = vweird.f32 %v1064
    %vm1082 = vweird.f32 %v1075
    %vm1083 = vmor %vm1081, %vm1082
    %v1084 = vsel %vm1083, %v1075, %v1080
    %v1085 = vmul.f32 %v1043, %v1074
    %v1086 = vmul.f32 %v1044, %v1084
    %v1087 = vperm.slane %v1027, 0
    %1089 = vrot.lane.b32.xlu0 %v1087, 64
    %v1090 = vpop.permute.xlu0 %1089
    %v1092 = vmul.f32 %v1085, %v1090
    %v1093 = vmul.f32 %v1086, %v1090
    %v1094 = vperm.slane %v1028, 0
    %1096 = vrot.lane.b32.xlu0 %v1094, 64
    %v1097 = vpop.permute.xlu0 %1096
    %v1099 = vadd.f32 %v1092, %v1097
    %v1100 = vadd.f32 %v1093, %v1097
    %v1101 = vxor.u32 %v1099, 2147483648
    %v1102 = vxor.u32 %v1100, 2147483648
    %v1103 = vmul.f32 %v1101, 1.442695
    %v1104 = vpow.pop %v1103
    %v1105 = vmul.f32 %v1102, 1.442695
    %v1106 = vpow.pop %v1105
    %v1107 = vadd.f32 %v1104, 1.0
    %v1108 = vadd.f32 %v1106, 1.0
    %v1109 = vrcp.pop %v1107
    %v1110 = vmul.f32 %v1107, %v1109
    %v1111 = vsub.f32 1.0, %v1110
    %v1112 = vmul.f32 %v1109, %v1111
    %v1113 = vadd.f32 %v1109, %v1112
    %vm1114 = vweird.f32 %v1107
    %vm1115 = vweird.f32 %v1109
    %vm1116 = vmor %vm1114, %vm1115
    %v1117 = vsel %vm1116, %v1109, %v1113
    %v1118 = vand.u32 2147483647, %v1107
    %vm1119 = vcmp.eq.f32.partialorder %v1118, 8.507059e+37
    %v1120 = vand.u32 %v1107, 2147483648
    %v1121 = vor.u32 1.1754944e-38, %v1120
    %v1122 = vsel %vm1119, %v1121, %v1117
    %v1123 = vmul.f32 1.0, %v1122
    %v1124 = vrcp.pop %v1108
    %v1125 = vmul.f32 %v1108, %v1124
    %v1126 = vsub.f32 1.0, %v1125
    %v1127 = vmul.f32 %v1124, %v1126
    %v1128 = vadd.f32 %v1124, %v1127
    %vm1129 = vweird.f32 %v1108
    %vm1130 = vweird.f32 %v1124
    %vm1131 = vmor %vm1129, %vm1130
    %v1132 = vsel %vm1131, %v1124, %v1128
    %v1133 = vand.u32 2147483647, %v1108
    %vm1134 = vcmp.eq.f32.partialorder %v1133, 8.507059e+37
    %v1135 = vand.u32 %v1108, 2147483648
    %v1136 = vor.u32 1.1754944e-38, %v1135
    %v1137 = vsel %vm1134, %v1136, %v1132
    %v1138 = vmul.f32 1.0, %v1137
    %v1139 = vld [vmem:[#allocation8 + $0x8] sm:$0x1]
    %v1140 = vld [vmem:[#allocation8 + $0x9] sm:$0x1]
    %1141 = vrot.lane.b32.xlu0 %v911, 32
    %v1142 = vpop.permute.xlu0 %1141
    %1143 = vrot.lane.b32.xlu0 %v912, 32
    %v1144 = vpop.permute.xlu0 %1143
    %v1147 = vsel %vm96, %v1142, 0.0
    %1148 = vadd.xlane.f32.xlu0 %v1147
    %v1149 = vpop.xlane.xlu0 %1148
    %v1150 = vsel %vm96, %v1144, 0.0
    %1151 = vadd.xlane.f32.xlu0 %v1150
    %v1152 = vpop.xlane.xlu0 %1151
    %v1153 = vmul.f32 %v1149, %v266
    %v1154 = vmul.f32 %v1152, %v266
    %v1155 = vsub.f32 %v911, %v1153
    %v1156 = vsub.f32 %v912, %v1154
    %v1157 = vmul.f32 %v1155, %v1155
    %v1158 = vmul.f32 %v1156, %v1156
    %1161 = vrot.lane.b32.xlu0 %v1157, 32
    %v1162 = vpop.permute.xlu0 %1161
    %1163 = vrot.lane.b32.xlu0 %v1158, 32
    %v1164 = vpop.permute.xlu0 %1163
    %v1167 = vsel %vm96, %v1162, 0.0
    %1168 = vadd.xlane.f32.xlu0 %v1167
    %v1169 = vpop.xlane.xlu0 %1168
    %v1170 = vsel %vm96, %v1164, 0.0
    %1171 = vadd.xlane.f32.xlu0 %v1170
    %v1172 = vpop.xlane.xlu0 %1171
    %v1173 = vmul.f32 %v1169, %v266
    %v1174 = vmul.f32 %v1172, %v266
    %v1175 = vadd.f32 %v1173, 1e-05
    %v1176 = vadd.f32 %v1174, 1e-05
    %v1177 = vrsqrt.pop %v1175
    %v1178 = vmul.f32 %v1177, %v1175
    %v1179 = vmul.f32 %v1178, %v1177
    %v1180 = vmul.f32 0.5, %v1179
    %v1181 = vsub.f32 1.5, %v1180
    %v1182 = vmul.f32 %v1177, %v1181
    %vm1183 = vweird.f32 %v1175
    %vm1184 = vweird.f32 %v1177
    %vm1185 = vmor %vm1183, %vm1184
    %v1186 = vsel %vm1185, %v1177, %v1182
    %v1187 = vrsqrt.pop %v1176
    %v1188 = vmul.f32 %v1187, %v1176
    %v1189 = vmul.f32 %v1188, %v1187
    %v1190 = vmul.f32 0.5, %v1189
    %v1191 = vsub.f32 1.5, %v1190
    %v1192 = vmul.f32 %v1187, %v1191
    %vm1193 = vweird.f32 %v1176
    %vm1194 = vweird.f32 %v1187
    %vm1195 = vmor %vm1193, %vm1194
    %v1196 = vsel %vm1195, %v1187, %v1192
    %v1197 = vmul.f32 %v1155, %v1186
    %v1198 = vmul.f32 %v1156, %v1196
    %v1199 = vperm.slane %v1139, 0
    %1201 = vrot.lane.b32.xlu0 %v1199, 96
    %v1202 = vpop.permute.xlu0 %1201
    %v1204 = vmul.f32 %v1197, %v1202
    %v1205 = vmul.f32 %v1198, %v1202
    %v1206 = vperm.slane %v1140, 0
    %1208 = vrot.lane.b32.xlu0 %v1206, 96
    %v1209 = vpop.permute.xlu0 %1208
    %v1211 = vadd.f32 %v1204, %v1209
    %v1212 = vadd.f32 %v1205, %v1209
    %v1213 = vtanh.pop %v1211
    %v1214 = vtanh.pop %v1212
    %1217 = vrot.lane.b32.xlu0 %v1213, 64
    %v1218 = vpop.permute.xlu0 %1217
    %1219 = vrot.lane.b32.xlu0 %v1214, 64
    %v1220 = vpop.permute.xlu0 %1219
    %v1223 = vmul.f32 %v1011, %v1218
    %v1224 = vmul.f32 %v1026, %v1220
    %1227 = vrot.lane.b32.xlu0 %v765, 32
    %v1228 = vpop.permute.xlu0 %1227
    %1229 = vrot.lane.b32.xlu0 %v766, 32
    %v1230 = vpop.permute.xlu0 %1229
    %v1233 = vadd.f32 %v1223, %v1228
    %v1234 = vadd.f32 %v1224, %v1230
    %v1235 = vld [vmem:[#allocation8 + $0xa] sm:$0x1]
    %v1236 = vld [vmem:[#allocation8 + $0xb] sm:$0x1]
    %1239 = vrot.lane.b32.xlu0 %v1233, 96
    %v1240 = vpop.permute.xlu0 %1239
    %1241 = vrot.lane.b32.xlu0 %v1234, 96
    %v1242 = vpop.permute.xlu0 %1241
    %v1245 = vsel %vm96, %v1240, 0.0
    %1246 = vadd.xlane.f32.xlu0 %v1245
    %v1247 = vpop.xlane.xlu0 %1246
    %v1248 = vsel %vm96, %v1242, 0.0
    %1249 = vadd.xlane.f32.xlu0 %v1248
    %v1250 = vpop.xlane.xlu0 %1249
    %v1251 = vmul.f32 %v1247, %v266
    %v1252 = vmul.f32 %v1250, %v266
    %v1253 = vsub.f32 %v1233, %v1251
    %v1254 = vsub.f32 %v1234, %v1252
    %v1255 = vmul.f32 %v1253, %v1253
    %v1256 = vmul.f32 %v1254, %v1254
    %1259 = vrot.lane.b32.xlu0 %v1255, 96
    %v1260 = vpop.permute.xlu0 %1259
    %1261 = vrot.lane.b32.xlu0 %v1256, 96
    %v1262 = vpop.permute.xlu0 %1261
    %v1265 = vsel %vm96, %v1260, 0.0
    %1266 = vadd.xlane.f32.xlu0 %v1265
    %v1267 = vpop.xlane.xlu0 %1266
    %v1268 = vsel %vm96, %v1262, 0.0
    %1269 = vadd.xlane.f32.xlu0 %v1268
    %v1270 = vpop.xlane.xlu0 %1269
    %v1271 = vmul.f32 %v1267, %v266
    %v1272 = vmul.f32 %v1270, %v266
    %v1273 = vadd.f32 %v1271, 1e-05
    %v1274 = vadd.f32 %v1272, 1e-05
    %v1275 = vrsqrt.pop %v1273
    %v1276 = vmul.f32 %v1275, %v1273
    %v1277 = vmul.f32 %v1276, %v1275
    %v1278 = vmul.f32 0.5, %v1277
    %v1279 = vsub.f32 1.5, %v1278
    %v1280 = vmul.f32 %v1275, %v1279
    %vm1281 = vweird.f32 %v1273
    %vm1282 = vweird.f32 %v1275
    %vm1283 = vmor %vm1281, %vm1282
    %v1284 = vsel %vm1283, %v1275, %v1280
    %v1285 = vrsqrt.pop %v1274
    %v1286 = vmul.f32 %v1285, %v1274
    %v1287 = vmul.f32 %v1286, %v1285
    %v1288 = vmul.f32 0.5, %v1287
    %v1289 = vsub.f32 1.5, %v1288
    %v1290 = vmul.f32 %v1285, %v1289
    %vm1291 = vweird.f32 %v1274
    %vm1292 = vweird.f32 %v1285
    %vm1293 = vmor %vm1291, %vm1292
    %v1294 = vsel %vm1293, %v1285, %v1290
    %v1295 = vmul.f32 %v1253, %v1284
    %v1296 = vmul.f32 %v1254, %v1294
    %v1297 = vperm.slane %v1235, 0
    %1299 = vrot.lane.b32.xlu0 %v1297, 32
    %v1300 = vpop.permute.xlu0 %1299
    %v1302 = vmul.f32 %v1295, %v1300
    %v1303 = vmul.f32 %v1296, %v1300
    %v1304 = vperm.slane %v1236, 0
    %1306 = vrot.lane.b32.xlu0 %v1304, 32
    %v1307 = vpop.permute.xlu0 %1306
    %v1309 = vadd.f32 %v1302, %v1307
    %v1310 = vadd.f32 %v1303, %v1307
    %v1311 = vtanh.pop %v1309
    %v1312 = vtanh.pop %v1310
    %1315 = vrot.lane.b32.xlu0 %v1311, 32
    %v1316 = vpop.permute.xlu0 %1315
    %1317 = vrot.lane.b32.xlu0 %v1312, 32
    %v1318 = vpop.permute.xlu0 %1317
    %v1321 = vmul.f32 %v1123, %v1316
    %v1322 = vmul.f32 %v1138, %v1318
    %1325 = vrot.lane.b32.xlu0 %v1321, 64
    %v1326 = vpop.permute.xlu0 %1325
    %1327 = vrot.lane.b32.xlu0 %v1322, 64
    %v1328 = vpop.permute.xlu0 %1327
    %v1331 = vsel %vm96, %v1326, %v1309
    %v1332 = vsel %vm96, %v1328, %v1310
    %1333 = vst.msk [vmem:[#allocation10] sm:$0xff] %vm142, %v1331
    %1334 = vst.msk [vmem:[#allocation10 + $0x8] sm:$0xff] %vm142, %v1332
    // Predicated region
    $region46: #{tpu_custom_call.1} parent=1 // pred_check
      _
    $region47: #{tpu_custom_call.1} parent=1 // pred_check_branch
      %1336 = sbr.rel (0) target = $region49
    $region48: #{tpu_custom_call.1} parent=1 // pred_region
      %1338 = vsyncadd [#allocation4], 0
      %s1339 = sshll.u32 [#allocation10], 4
      %s1340 = int_to_ptr.vmem [resolvable:$true] %s1339
      %s1341 = sshll.u32 %s7, 4
      %s1342 = int_to_ptr.hbm [resolvable:$true] %s1341
      %1347 = dma.vmem_to_hbm [thread:$0]  %s1340, 256, %s1342, [#allocation4], 128, 128, 8
    $region49: #{tpu_custom_call.1} parent=1 // pred_fallthru
      _
    // Predicated region
    $region50: #{tpu_custom_call.1} parent=1 // pred_check
      _
    $region51: #{tpu_custom_call.1} parent=1 // pred_check_branch
      %1349 = sbr.rel (0) target = $region53
    $region52: #{tpu_custom_call.1} parent=1 // pred_region
      %1351 = dma.done [#allocation4], 256
    $region53: #{tpu_custom_call.1} parent=1 // pred_fallthru
      _
    %1352 = vsyncpa [#allocation3], 1
    %1353 = vsyncpa [#allocation6], 1
    %1354 = vsyncpa [#allocation9], 1
    %1355 = vsyncpa [#allocation4], 1

</llo_original>
